<compile_context>
chip_gen: v7x
topology: tpu7x:2x2x1
jax: 0.10.0
libtpu: 0.0.40
codegen_flags: <defaults>
</compile_context>

<pallas_src>
import functools

import jax
import jax.numpy as jnp
from jax.experimental import pallas as pl
from jax.experimental.pallas import tpu as pltpu


def _round_up(v, m):
    return (v + m - 1) // m * m


# ----------------------------------------------------------------------------
# Fused forward kernel: all layers + log_softmax, everything VMEM-resident.
# refs = (w_l_1, w_r_1, b_1, ..., w_l_L, w_r_L, b_L, out)
# ----------------------------------------------------------------------------
def fused_sage_kernel(a_ref, x_ref, inv_deg_ref, *refs, num_layers, num_classes):
    o_ref = refs[-1]
    wb = refs[:-1]

    a = a_ref[...]                # bf16 (N, N), exact 0/1 adjacency (+ self loops)
    inv_deg = inv_deg_ref[...]    # f32  (N, 1), 1/deg for mean aggregation
    h = x_ref[...]                # bf16 (N, F_in)

    for li in range(num_layers):
        w_l = wb[3 * li][...]       # bf16 (F_in_l, F_out_l)
        w_r = wb[3 * li + 1][...]   # bf16 (F_in_l, F_out_l)
        b = wb[3 * li + 2][...]     # f32  (1, F_out_l)

        # Mean aggregation: MXU matmul with f32 accumulation, then per-row
        # 1/deg applied in f32 on the accumulator.
        agg = jnp.dot(a, h, preferred_element_type=jnp.float32) * inv_deg

        # lin_l(agg) + lin_r(h): two MXU matmuls accumulated in f32
        # (no lane-axis concat / relayout of the operands).
        z = (jnp.dot(agg.astype(jnp.bfloat16), w_l,
                     preferred_element_type=jnp.float32)
             + jnp.dot(h, w_r, preferred_element_type=jnp.float32)
             + b)

        if li < num_layers - 1:
            # ReLU; dropout skipped (eval mode => identity).
            h = jnp.maximum(z, 0.0).astype(jnp.bfloat16)
        else:
            # Exclude padded class columns from the log_softmax, then store
            # the full lane-dense (N, C_pad) slab in one unmasked store.
            col = jax.lax.broadcasted_iota(jnp.int32, z.shape, dimension=1)
            z = jnp.where(col < num_classes, z, jnp.float32(-1e30))
            m = jnp.max(z, axis=-1, keepdims=True)
            zc = z - m
            lse = jnp.log(jnp.sum(jnp.exp(zc), axis=-1, keepdims=True))
            o_ref[...] = (zc - lse).astype(o_ref.dtype)


# ----------------------------------------------------------------------------
# One-time preparation (hoisted out of the per-call forward path)
# ----------------------------------------------------------------------------
def prepare_inputs(x, adj01):
    """bf16 node features, exact-0/1 bf16 adjacency, f32 inverse degree."""
    deg = jnp.maximum(jnp.sum(adj01, axis=1, keepdims=True), 1.0)
    inv_deg = (1.0 / deg).astype(jnp.float32)
    return x.astype(jnp.bfloat16), adj01.astype(jnp.bfloat16), inv_deg


def prepare_params(params, lane=128):
    """bf16 weights, f32 (1, F_out) biases; last layer padded to a lane-dense
    class dim with zero columns."""
    prepped = []
    num_layers = len(params)
    for li, (w_l, w_r, b) in enumerate(params):
        b = b.reshape(1, -1)
        if li == num_layers - 1:
            f_out = w_l.shape[1]
            pad = _round_up(f_out, lane) - f_out
            if pad:
                w_l = jnp.pad(w_l, ((0, 0), (0, pad)))
                w_r = jnp.pad(w_r, ((0, 0), (0, pad)))
                b = jnp.pad(b, ((0, 0), (0, pad)))
        prepped.append((w_l.astype(jnp.bfloat16),
                        w_r.astype(jnp.bfloat16),
                        b.astype(jnp.float32)))
    return prepped


# ----------------------------------------------------------------------------
# Forward wrapper: single pallas_call, no grid, whole-array VMEM blocks.
# ----------------------------------------------------------------------------
def sage_forward(x_bf, a_bf, inv_deg, prepped_params, num_classes):
    n = x_bf.shape[0]
    c_pad = prepped_params[-1][0].shape[1]
    num_layers = len(prepped_params)

    args = [a_bf, x_bf, inv_deg]
    for w_l, w_r, b in prepped_params:
        args += [w_l, w_r, b]

    kernel = functools.partial(fused_sage_kernel,
                               num_layers=num_layers,
                               num_classes=num_classes)

    out_pad = pl.pallas_call(
        kernel,
        out_shape=jax.ShapeDtypeStruct((n, c_pad), jnp.float32),
        in_specs=[pl.BlockSpec(memory_space=pltpu.MemorySpace.VMEM)
                  for _ in args],
        out_specs=pl.BlockSpec(memory_space=pltpu.MemorySpace.VMEM),
    )(*args)

    # Slice away the padded class columns (lane-dense store inside the kernel).
    return out_pad[:, :num_classes]


# ----------------------------------------------------------------------------
# Pure-JAX reference (same bf16 operands / f32 accumulation) for validation
# ----------------------------------------------------------------------------
def sage_reference(x, adj01, params):
    deg = jnp.maximum(jnp.sum(adj01, axis=1, keepdims=True), 1.0)
    inv_deg = (1.0 / deg).astype(jnp.float32)
    a = adj01.astype(jnp.bfloat16)
    h = x.astype(jnp.bfloat16)
    for li, (w_l, w_r, b) in enumerate(params):
        agg = jnp.dot(a, h, preferred_element_type=jnp.float32) * inv_deg
        z = (jnp.dot(agg.astype(jnp.bfloat16), w_l.astype(jnp.bfloat16),
                     preferred_element_type=jnp.float32)
             + jnp.dot(h, w_r.astype(jnp.bfloat16),
                       preferred_element_type=jnp.float32)
             + b.reshape(1, -1))
        if li < len(params) - 1:
            h = jnp.maximum(z, 0.0).astype(jnp.bfloat16)
        else:
            return jax.nn.log_softmax(z, axis=-1)


# ----------------------------------------------------------------------------
# Deterministic parameter / input construction
# ----------------------------------------------------------------------------
def make_params(key, in_channels, hidden_channels, out_channels, num_layers):
    dims = ([in_channels]
            + [hidden_channels] * (num_layers - 1)
            + [out_channels])
    params = []
    for li in range(num_layers):
        f_in, f_out = dims[li], dims[li + 1]
        key, k1, k2 = jax.random.split(key, 3)
        scale = 1.0 / jnp.sqrt(jnp.float32(f_in))
        w_l = jax.random.normal(k1, (f_in, f_out), jnp.float32) * scale
        w_r = jax.random.normal(k2, (f_in, f_out), jnp.float32) * scale
        b = jnp.zeros((1, f_out), jnp.float32)
        params.append((w_l, w_r, b))
    return params


if __name__ == "__main__":
    N = 128            # number of graph nodes
    IN_C = 64          # in_channels
    HID_C = 64         # hidden_channels
    OUT_C = 32         # out_channels (num classes)
    NUM_LAYERS = 3

    key = jax.random.PRNGKey(0)
    kx, ka, kp = jax.random.split(key, 3)

    # node features
    x = jax.random.normal(kx, (N, IN_C), jnp.float32)

    # random sparse-ish 0/1 adjacency with self-loops (mean aggregation uses
    # the in-kernel f32 1/deg scale, so A itself stays exactly 0/1)
    adj = (jax.random.uniform(ka, (N, N)) < 0.05).astype(jnp.float32)
    adj = jnp.maximum(adj, jnp.eye(N, dtype=jnp.float32))

    params = make_params(kp, IN_C, HID_C, OUT_C, NUM_LAYERS)

    # one-time prep, hoisted out of the forward path
    x_bf, a_bf, inv_deg = prepare_inputs(x, adj)
    prepped = prepare_params(params)

    out = sage_forward(x_bf, a_bf, inv_deg, prepped, OUT_C)
    out = jax.block_until_ready(out)

    assert out.shape == (N, OUT_C)
    # log_softmax rows should (approximately) exponentiate-sum to 1
    row_sums = jnp.sum(jnp.exp(out), axis=-1)
    assert jnp.allclose(row_sums, 1.0, atol=1e-4)

    # cross-check against pure-JAX reference with matching bf16/f32 math
    ref = jax.block_until_ready(sage_reference(x, adj, params))
    assert jnp.allclose(out, ref, atol=2e-2, rtol=2e-2)

    print("KERNEL_OK")
</pallas_src>

<mosaic_0001>
module attributes {stable_mosaic.version = 11 : i64} {
  func.func @fused_sage_kernel(%arg0: memref<128x128xbf16, #tpu.memory_space<vmem>>, %arg1: memref<128x64xbf16, #tpu.memory_space<vmem>>, %arg2: memref<128x1xf32, #tpu.memory_space<vmem>>, %arg3: memref<64x64xbf16, #tpu.memory_space<vmem>>, %arg4: memref<64x64xbf16, #tpu.memory_space<vmem>>, %arg5: memref<1x64xf32, #tpu.memory_space<vmem>>, %arg6: memref<64x64xbf16, #tpu.memory_space<vmem>>, %arg7: memref<64x64xbf16, #tpu.memory_space<vmem>>, %arg8: memref<1x64xf32, #tpu.memory_space<vmem>>, %arg9: memref<64x128xbf16, #tpu.memory_space<vmem>>, %arg10: memref<64x128xbf16, #tpu.memory_space<vmem>>, %arg11: memref<1x128xf32, #tpu.memory_space<vmem>>, %arg12: memref<128x128xf32, #tpu.memory_space<vmem>>) attributes {dimension_semantics = [], scalar_prefetch = 0 : i64, scratch_operands = 0 : i64, tpu.core_type = #tpu.core_type<tc>} {
    %c0 = arith.constant 0 : index
    %c0_0 = arith.constant 0 : index
    %0 = vector.load %arg0[%c0, %c0_0] : memref<128x128xbf16, #tpu.memory_space<vmem>>, vector<128x128xbf16>
    %c0_1 = arith.constant 0 : index
    %c0_2 = arith.constant 0 : index
    %1 = vector.load %arg2[%c0_1, %c0_2] : memref<128x1xf32, #tpu.memory_space<vmem>>, vector<128x1xf32>
    %c0_3 = arith.constant 0 : index
    %c0_4 = arith.constant 0 : index
    %2 = vector.load %arg1[%c0_3, %c0_4] : memref<128x64xbf16, #tpu.memory_space<vmem>>, vector<128x64xbf16>
    %c0_5 = arith.constant 0 : index
    %c0_6 = arith.constant 0 : index
    %3 = vector.load %arg3[%c0_5, %c0_6] : memref<64x64xbf16, #tpu.memory_space<vmem>>, vector<64x64xbf16>
    %c0_7 = arith.constant 0 : index
    %c0_8 = arith.constant 0 : index
    %4 = vector.load %arg4[%c0_7, %c0_8] : memref<64x64xbf16, #tpu.memory_space<vmem>>, vector<64x64xbf16>
    %c0_9 = arith.constant 0 : index
    %c0_10 = arith.constant 0 : index
    %5 = vector.load %arg5[%c0_9, %c0_10] : memref<1x64xf32, #tpu.memory_space<vmem>>, vector<1x64xf32>
    %cst = arith.constant dense<0.000000e+00> : vector<128x64xf32>
    %6 = tpu.matmul %0, %2, %cst {dimension_numbers = #tpu.dot_dimension_numbers<[1], [0], [0], [1], [0, 0, 1, 1], [], []>} : vector<128x128xbf16>, vector<128x64xbf16>, vector<128x64xf32> -> vector<128x64xf32>
    %7 = vector.broadcast %1 : vector<128x1xf32> to vector<128x64xf32>
    %8 = arith.mulf %6, %7 : vector<128x64xf32>
    %9 = arith.truncf %8 : vector<128x64xf32> to vector<128x64xbf16>
    %cst_11 = arith.constant dense<0.000000e+00> : vector<128x64xf32>
    %10 = tpu.matmul %9, %3, %cst_11 {dimension_numbers = #tpu.dot_dimension_numbers<[1], [0], [0], [1], [0, 0, 1, 1], [], []>} : vector<128x64xbf16>, vector<64x64xbf16>, vector<128x64xf32> -> vector<128x64xf32>
    %cst_12 = arith.constant dense<0.000000e+00> : vector<128x64xf32>
    %11 = tpu.matmul %2, %4, %cst_12 {dimension_numbers = #tpu.dot_dimension_numbers<[1], [0], [0], [1], [0, 0, 1, 1], [], []>} : vector<128x64xbf16>, vector<64x64xbf16>, vector<128x64xf32> -> vector<128x64xf32>
    %12 = arith.addf %10, %11 : vector<128x64xf32>
    %13 = vector.broadcast %5 : vector<1x64xf32> to vector<128x64xf32>
    %14 = arith.addf %12, %13 : vector<128x64xf32>
    %cst_13 = arith.constant 0.000000e+00 : f32
    %15 = vector.broadcast %cst_13 : f32 to vector<128x64xf32>
    %16 = arith.maximumf %14, %15 : vector<128x64xf32>
    %17 = arith.truncf %16 : vector<128x64xf32> to vector<128x64xbf16>
    %c0_14 = arith.constant 0 : index
    %c0_15 = arith.constant 0 : index
    %18 = vector.load %arg6[%c0_14, %c0_15] : memref<64x64xbf16, #tpu.memory_space<vmem>>, vector<64x64xbf16>
    %c0_16 = arith.constant 0 : index
    %c0_17 = arith.constant 0 : index
    %19 = vector.load %arg7[%c0_16, %c0_17] : memref<64x64xbf16, #tpu.memory_space<vmem>>, vector<64x64xbf16>
    %c0_18 = arith.constant 0 : index
    %c0_19 = arith.constant 0 : index
    %20 = vector.load %arg8[%c0_18, %c0_19] : memref<1x64xf32, #tpu.memory_space<vmem>>, vector<1x64xf32>
    %cst_20 = arith.constant dense<0.000000e+00> : vector<128x64xf32>
    %21 = tpu.matmul %0, %17, %cst_20 {dimension_numbers = #tpu.dot_dimension_numbers<[1], [0], [0], [1], [0, 0, 1, 1], [], []>} : vector<128x128xbf16>, vector<128x64xbf16>, vector<128x64xf32> -> vector<128x64xf32>
    %22 = vector.broadcast %1 : vector<128x1xf32> to vector<128x64xf32>
    %23 = arith.mulf %21, %22 : vector<128x64xf32>
    %24 = arith.truncf %23 : vector<128x64xf32> to vector<128x64xbf16>
    %cst_21 = arith.constant dense<0.000000e+00> : vector<128x64xf32>
    %25 = tpu.matmul %24, %18, %cst_21 {dimension_numbers = #tpu.dot_dimension_numbers<[1], [0], [0], [1], [0, 0, 1, 1], [], []>} : vector<128x64xbf16>, vector<64x64xbf16>, vector<128x64xf32> -> vector<128x64xf32>
    %cst_22 = arith.constant dense<0.000000e+00> : vector<128x64xf32>
    %26 = tpu.matmul %17, %19, %cst_22 {dimension_numbers = #tpu.dot_dimension_numbers<[1], [0], [0], [1], [0, 0, 1, 1], [], []>} : vector<128x64xbf16>, vector<64x64xbf16>, vector<128x64xf32> -> vector<128x64xf32>
    %27 = arith.addf %25, %26 : vector<128x64xf32>
    %28 = vector.broadcast %20 : vector<1x64xf32> to vector<128x64xf32>
    %29 = arith.addf %27, %28 : vector<128x64xf32>
    %cst_23 = arith.constant 0.000000e+00 : f32
    %30 = vector.broadcast %cst_23 : f32 to vector<128x64xf32>
    %31 = arith.maximumf %29, %30 : vector<128x64xf32>
    %32 = arith.truncf %31 : vector<128x64xf32> to vector<128x64xbf16>
    %c0_24 = arith.constant 0 : index
    %c0_25 = arith.constant 0 : index
    %33 = vector.load %arg9[%c0_24, %c0_25] : memref<64x128xbf16, #tpu.memory_space<vmem>>, vector<64x128xbf16>
    %c0_26 = arith.constant 0 : index
    %c0_27 = arith.constant 0 : index
    %34 = vector.load %arg10[%c0_26, %c0_27] : memref<64x128xbf16, #tpu.memory_space<vmem>>, vector<64x128xbf16>
    %c0_28 = arith.constant 0 : index
    %c0_29 = arith.constant 0 : index
    %35 = vector.load %arg11[%c0_28, %c0_29] : memref<1x128xf32, #tpu.memory_space<vmem>>, vector<1x128xf32>
    %cst_30 = arith.constant dense<0.000000e+00> : vector<128x64xf32>
    %36 = tpu.matmul %0, %32, %cst_30 {dimension_numbers = #tpu.dot_dimension_numbers<[1], [0], [0], [1], [0, 0, 1, 1], [], []>} : vector<128x128xbf16>, vector<128x64xbf16>, vector<128x64xf32> -> vector<128x64xf32>
    %37 = vector.broadcast %1 : vector<128x1xf32> to vector<128x64xf32>
    %38 = arith.mulf %36, %37 : vector<128x64xf32>
    %39 = arith.truncf %38 : vector<128x64xf32> to vector<128x64xbf16>
    %cst_31 = arith.constant dense<0.000000e+00> : vector<128x128xf32>
    %40 = tpu.matmul %39, %33, %cst_31 {dimension_numbers = #tpu.dot_dimension_numbers<[1], [0], [0], [1], [0, 0, 1, 1], [], []>} : vector<128x64xbf16>, vector<64x128xbf16>, vector<128x128xf32> -> vector<128x128xf32>
    %cst_32 = arith.constant dense<0.000000e+00> : vector<128x128xf32>
    %41 = tpu.matmul %32, %34, %cst_32 {dimension_numbers = #tpu.dot_dimension_numbers<[1], [0], [0], [1], [0, 0, 1, 1], [], []>} : vector<128x64xbf16>, vector<64x128xbf16>, vector<128x128xf32> -> vector<128x128xf32>
    %42 = arith.addf %40, %41 : vector<128x128xf32>
    %43 = vector.broadcast %35 : vector<1x128xf32> to vector<128x128xf32>
    %44 = arith.addf %42, %43 : vector<128x128xf32>
    %45 = tpu.iota {dimensions = array<i32: 1>} : vector<128x128xi32>
    %c32_i32 = arith.constant 32 : i32
    %46 = vector.broadcast %c32_i32 : i32 to vector<128x128xi32>
    %47 = arith.cmpi slt, %45, %46 : vector<128x128xi32>
    %cst_33 = arith.constant -1.000000e+30 : f32
    %48 = vector.broadcast %cst_33 : f32 to vector<128x128xf32>
    %49 = arith.select %47, %44, %48 : vector<128x128xi1>, vector<128x128xf32>
    %cst_34 = arith.constant dense<0xFF800000> : vector<128xf32>
    %50 = vector.multi_reduction <maximumf>, %49, %cst_34 [1] : vector<128x128xf32> to vector<128xf32>
    %51 = vector.shape_cast %50 : vector<128xf32> to vector<128x1xf32>
    %52 = vector.broadcast %51 : vector<128x1xf32> to vector<128x128xf32>
    %53 = arith.subf %49, %52 : vector<128x128xf32>
    %54 = math.exp %53 : vector<128x128xf32>
    %cst_35 = arith.constant dense<0.000000e+00> : vector<128xf32>
    %55 = vector.multi_reduction <add>, %54, %cst_35 [1] : vector<128x128xf32> to vector<128xf32>
    %56 = vector.shape_cast %55 : vector<128xf32> to vector<128x1xf32>
    %57 = math.log %56 : vector<128x1xf32>
    %58 = vector.broadcast %57 : vector<128x1xf32> to vector<128x128xf32>
    %59 = arith.subf %53, %58 : vector<128x128xf32>
    %c0_36 = arith.constant 0 : index
    %c0_37 = arith.constant 0 : index
    %60 = vector.load %arg12[%c0_36, %c0_37] : memref<128x128xf32, #tpu.memory_space<vmem>>, vector<128x128xf32>
    tpu.vector_store %arg12[%c0_36, %c0_37], %59 {strides = array<i32>} : memref<128x128xf32, #tpu.memory_space<vmem>>, vector<128x128xf32>,
    return
  }
}

</mosaic_0001>

<llo_original>
// kernel: tpu_custom_call.1
$region0: #{tpu_custom_call.1}
  #allocation0 [shape = 'u32[]', space=smem, size = 0x4, offset = 0x4, fixed_abs, tag = 'smem constant byte address 0x4 - core index']
  #allocation1 [shape = 'u32[144,128]{1,0:T(1,128)}', space=vmem, size = 0x12000, scoped, tag = 'internal scratch']
  %s0 = inlined_call_operand.vmem [shape: bf16[128,128], index: 0, kind: input, shape index: {}]
  %s1 = inlined_call_operand.vmem [shape: bf16[128,64], index: 1, kind: input, shape index: {}]
  %s2 = inlined_call_operand.vmem [shape: f32[128,1], index: 2, kind: input, shape index: {}]
  %s3 = inlined_call_operand.vmem [shape: bf16[64,64], index: 3, kind: input, shape index: {}]
  %s4 = inlined_call_operand.vmem [shape: bf16[64,64], index: 4, kind: input, shape index: {}]
  %s5 = inlined_call_operand.vmem [shape: f32[1,64], index: 5, kind: input, shape index: {}]
  %s6 = inlined_call_operand.vmem [shape: bf16[64,64], index: 6, kind: input, shape index: {}]
  %s7 = inlined_call_operand.vmem [shape: bf16[64,64], index: 7, kind: input, shape index: {}]
  %s8 = inlined_call_operand.vmem [shape: f32[1,64], index: 8, kind: input, shape index: {}]
  %s9 = inlined_call_operand.vmem [shape: bf16[64,128], index: 9, kind: input, shape index: {}]
  %s10 = inlined_call_operand.vmem [shape: bf16[64,128], index: 10, kind: input, shape index: {}]
  %s11 = inlined_call_operand.vmem [shape: f32[1,128], index: 11, kind: input, shape index: {}]
  %s12 = inlined_call_operand.hbm [shape: f32[128,128], index: 12, kind: output, shape index: {}]
  %s13 = sld [smem:[#allocation0]]
  $region58: #{tpu_custom_call.1} parent=0
    _
  %s15 = ssub.s32 1, %s13
  %s16 = scalar_select 0, %s15, %s13
  $region1: #{tpu_custom_call.1} parent=0
    #allocation2 [shape = 'u8[65536]{0}', space=vmem, size = 0x10000, scoped, tag = 'output window, operand 0, single buffered']
    #allocation3 [shape = 's32[1]{0}', space=sflag, size = 0x4, scoped, tag = 'scoped memory for tpu_custom_call.1']
    %17 = vsyncpa [#allocation3], 0
    // Predicated region
    $region2: #{tpu_custom_call.1} parent=1 // pred_check
      _
    $region3: #{tpu_custom_call.1} parent=1 // pred_check_branch
      %19 = sbr.rel (0) target = $region5
    $region4: #{tpu_custom_call.1} parent=1 // pred_region
      _
    $region5: #{tpu_custom_call.1} parent=1 // pred_fallthru
      _
    // Predicated region
    $region6: #{tpu_custom_call.1} parent=1 // pred_check
      _
    $region7: #{tpu_custom_call.1} parent=1 // pred_check_branch
      %21 = sbr.rel (0) target = $region9
    $region8: #{tpu_custom_call.1} parent=1 // pred_region
      _
    $region9: #{tpu_custom_call.1} parent=1 // pred_fallthru
      _
    // Predicated region
    $region10: #{tpu_custom_call.1} parent=1 // pred_check
      _
    $region11: #{tpu_custom_call.1} parent=1 // pred_check_branch
      %23 = sbr.rel (0) target = $region13
    $region12: #{tpu_custom_call.1} parent=1 // pred_region
      _
    $region13: #{tpu_custom_call.1} parent=1 // pred_fallthru
      _
    // Predicated region
    $region14: #{tpu_custom_call.1} parent=1 // pred_check
      _
    $region15: #{tpu_custom_call.1} parent=1 // pred_check_branch
      %25 = sbr.rel (0) target = $region17
    $region16: #{tpu_custom_call.1} parent=1 // pred_region
      _
    $region17: #{tpu_custom_call.1} parent=1 // pred_fallthru
      _
    // Predicated region
    $region18: #{tpu_custom_call.1} parent=1 // pred_check
      _
    $region19: #{tpu_custom_call.1} parent=1 // pred_check_branch
      %27 = sbr.rel (0) target = $region21
    $region20: #{tpu_custom_call.1} parent=1 // pred_region
      _
    $region21: #{tpu_custom_call.1} parent=1 // pred_fallthru
      _
    // Predicated region
    $region22: #{tpu_custom_call.1} parent=1 // pred_check
      _
    $region23: #{tpu_custom_call.1} parent=1 // pred_check_branch
      %29 = sbr.rel (0) target = $region25
    $region24: #{tpu_custom_call.1} parent=1 // pred_region
      _
    $region25: #{tpu_custom_call.1} parent=1 // pred_fallthru
      _
    // Predicated region
    $region26: #{tpu_custom_call.1} parent=1 // pred_check
      _
    $region27: #{tpu_custom_call.1} parent=1 // pred_check_branch
      %31 = sbr.rel (0) target = $region29
    $region28: #{tpu_custom_call.1} parent=1 // pred_region
      _
    $region29: #{tpu_custom_call.1} parent=1 // pred_fallthru
      _
    // Predicated region
    $region30: #{tpu_custom_call.1} parent=1 // pred_check
      _
    $region31: #{tpu_custom_call.1} parent=1 // pred_check_branch
      %33 = sbr.rel (0) target = $region33
    $region32: #{tpu_custom_call.1} parent=1 // pred_region
      _
    $region33: #{tpu_custom_call.1} parent=1 // pred_fallthru
      _
    // Predicated region
    $region34: #{tpu_custom_call.1} parent=1 // pred_check
      _
    $region35: #{tpu_custom_call.1} parent=1 // pred_check_branch
      %35 = sbr.rel (0) target = $region37
    $region36: #{tpu_custom_call.1} parent=1 // pred_region
      _
    $region37: #{tpu_custom_call.1} parent=1 // pred_fallthru
      _
    // Predicated region
    $region38: #{tpu_custom_call.1} parent=1 // pred_check
      _
    $region39: #{tpu_custom_call.1} parent=1 // pred_check_branch
      %37 = sbr.rel (0) target = $region41
    $region40: #{tpu_custom_call.1} parent=1 // pred_region
      _
    $region41: #{tpu_custom_call.1} parent=1 // pred_fallthru
      _
    // Predicated region
    $region42: #{tpu_custom_call.1} parent=1 // pred_check
      _
    $region43: #{tpu_custom_call.1} parent=1 // pred_check_branch
      %39 = sbr.rel (0) target = $region45
    $region44: #{tpu_custom_call.1} parent=1 // pred_region
      _
    $region45: #{tpu_custom_call.1} parent=1 // pred_fallthru
      _
    // Predicated region
    $region46: #{tpu_custom_call.1} parent=1 // pred_check
      _
    $region47: #{tpu_custom_call.1} parent=1 // pred_check_branch
      %41 = sbr.rel (0) target = $region49
    $region48: #{tpu_custom_call.1} parent=1 // pred_region
      _
    $region49: #{tpu_custom_call.1} parent=1 // pred_fallthru
      _
    %v43 = vld [vmem:[%s0] sm:$0xf]
    %v44 = vld [vmem:[%s0 + $0x4] sm:$0xf]
    %v45 = vld [vmem:[%s0 + $0x8] sm:$0xf]
    %v46 = vld [vmem:[%s0 + $0xc] sm:$0xf]
    %v47 = vld [vmem:[%s0 + $0x10] sm:$0xf]
    %v48 = vld [vmem:[%s0 + $0x14] sm:$0xf]
    %v49 = vld [vmem:[%s0 + $0x18] sm:$0xf]
    %v50 = vld [vmem:[%s0 + $0x1c] sm:$0xf]
    %v51 = vld [vmem:[%s0 + $0x20] sm:$0xf]
    %v52 = vld [vmem:[%s0 + $0x24] sm:$0xf]
    %v53 = vld [vmem:[%s0 + $0x28] sm:$0xf]
    %v54 = vld [vmem:[%s0 + $0x2c] sm:$0xf]
    %v55 = vld [vmem:[%s0 + $0x30] sm:$0xf]
    %v56 = vld [vmem:[%s0 + $0x34] sm:$0xf]
    %v57 = vld [vmem:[%s0 + $0x38] sm:$0xf]
    %v58 = vld [vmem:[%s0 + $0x3c] sm:$0xf]
    %v59 = vld [vmem:[%s2] sm:$0xff]
    %v60 = vld [vmem:[%s2 + $0x8] sm:$0xff]
    %v61 = vld [vmem:[%s2 + $0x10] sm:$0xff]
    %v62 = vld [vmem:[%s2 + $0x18] sm:$0xff]
    %v63 = vld [vmem:[%s2 + $0x20] sm:$0xff]
    %v64 = vld [vmem:[%s2 + $0x28] sm:$0xff]
    %v65 = vld [vmem:[%s2 + $0x30] sm:$0xff]
    %v66 = vld [vmem:[%s2 + $0x38] sm:$0xff]
    %v67 = vld [vmem:[%s2 + $0x40] sm:$0xff]
    %v68 = vld [vmem:[%s2 + $0x48] sm:$0xff]
    %v69 = vld [vmem:[%s2 + $0x50] sm:$0xff]
    %v70 = vld [vmem:[%s2 + $0x58] sm:$0xff]
    %v71 = vld [vmem:[%s2 + $0x60] sm:$0xff]
    %v72 = vld [vmem:[%s2 + $0x68] sm:$0xff]
    %v73 = vld [vmem:[%s2 + $0x70] sm:$0xff]
    %v74 = vld [vmem:[%s2 + $0x78] sm:$0xff]
    %v75 = vld [vmem:[%s1] sm:$0xf]
    %v76 = vld [vmem:[%s1 + $0x4] sm:$0xf]
    %v77 = vld [vmem:[%s1 + $0x8] sm:$0xf]
    %v78 = vld [vmem:[%s1 + $0xc] sm:$0xf]
    %v79 = vld [vmem:[%s1 + $0x10] sm:$0xf]
    %v80 = vld [vmem:[%s1 + $0x14] sm:$0xf]
    %v81 = vld [vmem:[%s1 + $0x18] sm:$0xf]
    %v82 = vld [vmem:[%s1 + $0x1c] sm:$0xf]
    %v83 = vld [vmem:[%s1 + $0x20] sm:$0xf]
    %v84 = vld [vmem:[%s1 + $0x24] sm:$0xf]
    %v85 = vld [vmem:[%s1 + $0x28] sm:$0xf]
    %v86 = vld [vmem:[%s1 + $0x2c] sm:$0xf]
    %v87 = vld [vmem:[%s1 + $0x30] sm:$0xf]
    %v88 = vld [vmem:[%s1 + $0x34] sm:$0xf]
    %v89 = vld [vmem:[%s1 + $0x38] sm:$0xf]
    %v90 = vld [vmem:[%s1 + $0x3c] sm:$0xf]
    %v91 = vld [vmem:[%s3] sm:$0xf]
    %v92 = vld [vmem:[%s3 + $0x4] sm:$0xf]
    %v93 = vld [vmem:[%s3 + $0x8] sm:$0xf]
    %v94 = vld [vmem:[%s3 + $0xc] sm:$0xf]
    %v95 = vld [vmem:[%s3 + $0x10] sm:$0xf]
    %v96 = vld [vmem:[%s3 + $0x14] sm:$0xf]
    %v97 = vld [vmem:[%s3 + $0x18] sm:$0xf]
    %v98 = vld [vmem:[%s3 + $0x1c] sm:$0xf]
    %v99 = vld [vmem:[%s4] sm:$0xf]
    %v100 = vld [vmem:[%s4 + $0x4] sm:$0xf]
    %v101 = vld [vmem:[%s4 + $0x8] sm:$0xf]
    %v102 = vld [vmem:[%s4 + $0xc] sm:$0xf]
    %v103 = vld [vmem:[%s4 + $0x10] sm:$0xf]
    %v104 = vld [vmem:[%s4 + $0x14] sm:$0xf]
    %v105 = vld [vmem:[%s4 + $0x18] sm:$0xf]
    %v106 = vld [vmem:[%s4 + $0x1c] sm:$0xf]
    %v107 = vld [vmem:[%s5] sm:$0x1]
    %v124 = vunpack.c.l.b16 %v43
    %v125 = vunpack.c.l.b16 %v44
    %v126 = vunpack.c.l.b16 %v45
    %v127 = vunpack.c.l.b16 %v46
    %v128 = vunpack.c.l.b16 %v47
    %v129 = vunpack.c.l.b16 %v48
    %v130 = vunpack.c.l.b16 %v49
    %v131 = vunpack.c.l.b16 %v50
    %v132 = vunpack.c.l.b16 %v51
    %v133 = vunpack.c.l.b16 %v52
    %v134 = vunpack.c.l.b16 %v53
    %v135 = vunpack.c.l.b16 %v54
    %v136 = vunpack.c.l.b16 %v55
    %v137 = vunpack.c.l.b16 %v56
    %v138 = vunpack.c.l.b16 %v57
    %v139 = vunpack.c.l.b16 %v58
    %v140 = vpack.c.b16 %v125, %v124
    %v141 = vpack.c.b16 %v127, %v126
    %v142 = vpack.c.b16 %v129, %v128
    %v143 = vpack.c.b16 %v131, %v130
    %v144 = vpack.c.b16 %v133, %v132
    %v145 = vpack.c.b16 %v135, %v134
    %v146 = vpack.c.b16 %v137, %v136
    %v147 = vpack.c.b16 %v139, %v138
    %v172 = vunpack.c.l.b16 %v75
    %v173 = vunpack.c.l.b16 %v76
    %v174 = vunpack.c.l.b16 %v77
    %v175 = vunpack.c.l.b16 %v78
    %v176 = vunpack.c.l.b16 %v79
    %v177 = vunpack.c.l.b16 %v80
    %v178 = vunpack.c.l.b16 %v81
    %v179 = vunpack.c.l.b16 %v82
    %v180 = vunpack.c.l.b16 %v83
    %v181 = vunpack.c.l.b16 %v84
    %v182 = vunpack.c.l.b16 %v85
    %v183 = vunpack.c.l.b16 %v86
    %v184 = vunpack.c.l.b16 %v87
    %v185 = vunpack.c.l.b16 %v88
    %v186 = vunpack.c.l.b16 %v89
    %v187 = vunpack.c.l.b16 %v90
    %v188 = vpack.c.b16 %v173, %v172
    %v189 = vpack.c.b16 %v175, %v174
    %v190 = vpack.c.b16 %v177, %v176
    %v191 = vpack.c.b16 %v179, %v178
    %v192 = vpack.c.b16 %v181, %v180
    %v193 = vpack.c.b16 %v183, %v182
    %v194 = vpack.c.b16 %v185, %v184
    %v195 = vpack.c.b16 %v187, %v186
    %204 = vmatprep.subr.bf16.mxu0 0
    %205 = vmatpush1.bf16.msra.mxu0 %v188
    %206 = vmatprep.subr.bf16.mxu0 0
    %207 = vmatpush1.bf16.msra.mxu0 %v189
    %208 = vmatprep.subr.bf16.mxu0 0
    %209 = vmatpush1.bf16.msra.mxu0 %v190
    %210 = vmatprep.subr.bf16.mxu0 0
    %211 = vmatpush1.bf16.msra.mxu0 %v191
    %212 = vmatprep.subr.bf16.mxu0 0
    %213 = vmatpush1.bf16.msra.mxu0 %v192
    %214 = vmatprep.subr.bf16.mxu0 0
    %215 = vmatpush1.bf16.msra.mxu0 %v193
    %216 = vmatprep.subr.bf16.mxu0 0
    %217 = vmatpush1.bf16.msra.mxu0 %v194
    %218 = vmatprep.subr.bf16.mxu0 0
    %219 = vmatpush1.bf16.msra.mxu0 %v195
    %220 = vmatprep.subr.bf16.mxu0 0
    %221 = vmatpush1.bf16.msra.mxu0 0
    %222 = vmatprep.subr.bf16.mxu0 0
    %223 = vmatpush1.bf16.msra.mxu0 0
    %224 = vmatprep.subr.bf16.mxu0 0
    %225 = vmatpush1.bf16.msra.mxu0 0
    %226 = vmatprep.subr.bf16.mxu0 0
    %227 = vmatpush1.bf16.msra.mxu0 0
    %228 = vmatprep.subr.bf16.mxu0 0
    %229 = vmatpush1.bf16.msra.mxu0 0
    %230 = vmatprep.subr.bf16.mxu0 0
    %231 = vmatpush1.bf16.msra.mxu0 0
    %232 = vmatprep.subr.bf16.mxu0 0
    %233 = vmatpush1.bf16.msra.mxu0 0
    %234 = vmatprep.subr.bf16.mxu0 0
    %235 = vmatpush1.bf16.msra.mxu0 0
    %236 = vmatprep.mubr.bf16.mxu0 0
    %237 = vmatmul.mubr.bf16.gmra.mrb[0].mxu0 %v140
    %v238 = vpop.f32.mrb[0].mxu0
    %v239 = vadd.f32 0.0, %v238
    %v240 = vpop.f32.mrb[0].mxu0
    %v241 = vpop.f32.mrb[0].mxu0
    %v242 = vadd.f32 0.0, %v241
    %v243 = vpop.f32.mrb[0].mxu0
    %244 = vmatprep.mubr.bf16.mxu0 0
    %245 = vmatmul.mubr.bf16.gmra.mrb[0].mxu0 %v141
    %v246 = vpop.f32.mrb[0].mxu0
    %v247 = vadd.f32 0.0, %v246
    %v248 = vpop.f32.mrb[0].mxu0
    %v249 = vpop.f32.mrb[0].mxu0
    %v250 = vadd.f32 0.0, %v249
    %v251 = vpop.f32.mrb[0].mxu0
    %252 = vmatprep.mubr.bf16.mxu0 0
    %253 = vmatmul.mubr.bf16.gmra.mrb[0].mxu0 %v142
    %v254 = vpop.f32.mrb[0].mxu0
    %v255 = vadd.f32 0.0, %v254
    %v256 = vpop.f32.mrb[0].mxu0
    %v257 = vpop.f32.mrb[0].mxu0
    %v258 = vadd.f32 0.0, %v257
    %v259 = vpop.f32.mrb[0].mxu0
    %260 = vmatprep.mubr.bf16.mxu0 0
    %261 = vmatmul.mubr.bf16.gmra.mrb[0].mxu0 %v143
    %v262 = vpop.f32.mrb[0].mxu0
    %v263 = vadd.f32 0.0, %v262
    %v264 = vpop.f32.mrb[0].mxu0
    %v265 = vpop.f32.mrb[0].mxu0
    %v266 = vadd.f32 0.0, %v265
    %v267 = vpop.f32.mrb[0].mxu0
    %268 = vmatprep.mubr.bf16.mxu0 0
    %269 = vmatmul.mubr.bf16.gmra.mrb[0].mxu0 %v144
    %v270 = vpop.f32.mrb[0].mxu0
    %v271 = vadd.f32 0.0, %v270
    %v272 = vpop.f32.mrb[0].mxu0
    %v273 = vpop.f32.mrb[0].mxu0
    %v274 = vadd.f32 0.0, %v273
    %v275 = vpop.f32.mrb[0].mxu0
    %276 = vmatprep.mubr.bf16.mxu0 0
    %277 = vmatmul.mubr.bf16.gmra.mrb[0].mxu0 %v145
    %v278 = vpop.f32.mrb[0].mxu0
    %v279 = vadd.f32 0.0, %v278
    %v280 = vpop.f32.mrb[0].mxu0
    %v281 = vpop.f32.mrb[0].mxu0
    %v282 = vadd.f32 0.0, %v281
    %v283 = vpop.f32.mrb[0].mxu0
    %284 = vmatprep.mubr.bf16.mxu0 0
    %285 = vmatmul.mubr.bf16.gmra.mrb[0].mxu0 %v146
    %v286 = vpop.f32.mrb[0].mxu0
    %v287 = vadd.f32 0.0, %v286
    %v288 = vpop.f32.mrb[0].mxu0
    %v289 = vpop.f32.mrb[0].mxu0
    %v290 = vadd.f32 0.0, %v289
    %v291 = vpop.f32.mrb[0].mxu0
    %292 = vmatprep.mubr.bf16.mxu0 0
    %293 = vmatmul.mubr.bf16.gmra.mrb[0].mxu0 %v147
    %v294 = vpop.f32.mrb[0].mxu0
    %v295 = vadd.f32 0.0, %v294
    %v296 = vpop.f32.mrb[0].mxu0
    %v297 = vpop.f32.mrb[0].mxu0
    %v298 = vadd.f32 0.0, %v297
    %v299 = vpop.f32.mrb[0].mxu0
    %300 = vdwg.mxu0
    %302 = vset.pattern.permute.xlu0 0
    %303 = vperm.xlu0 %302, %v59
    %v304 = vpop.permute.xlu0 %303
    %307 = vset.pattern.permute.xlu0 0
    %308 = vperm.xlu0 %307, %v60
    %v309 = vpop.permute.xlu0 %308
    %312 = vset.pattern.permute.xlu0 0
    %313 = vperm.xlu0 %312, %v61
    %v314 = vpop.permute.xlu0 %313
    %317 = vset.pattern.permute.xlu0 0
    %318 = vperm.xlu0 %317, %v62
    %v319 = vpop.permute.xlu0 %318
    %322 = vset.pattern.permute.xlu0 0
    %323 = vperm.xlu0 %322, %v63
    %v324 = vpop.permute.xlu0 %323
    %327 = vset.pattern.permute.xlu0 0
    %328 = vperm.xlu0 %327, %v64
    %v329 = vpop.permute.xlu0 %328
    %332 = vset.pattern.permute.xlu0 0
    %333 = vperm.xlu0 %332, %v65
    %v334 = vpop.permute.xlu0 %333
    %337 = vset.pattern.permute.xlu0 0
    %338 = vperm.xlu0 %337, %v66
    %v339 = vpop.permute.xlu0 %338
    %342 = vset.pattern.permute.xlu0 0
    %343 = vperm.xlu0 %342, %v67
    %v344 = vpop.permute.xlu0 %343
    %347 = vset.pattern.permute.xlu0 0
    %348 = vperm.xlu0 %347, %v68
    %v349 = vpop.permute.xlu0 %348
    %352 = vset.pattern.permute.xlu0 0
    %353 = vperm.xlu0 %352, %v69
    %v354 = vpop.permute.xlu0 %353
    %357 = vset.pattern.permute.xlu0 0
    %358 = vperm.xlu0 %357, %v70
    %v359 = vpop.permute.xlu0 %358
    %362 = vset.pattern.permute.xlu0 0
    %363 = vperm.xlu0 %362, %v71
    %v364 = vpop.permute.xlu0 %363
    %367 = vset.pattern.permute.xlu0 0
    %368 = vperm.xlu0 %367, %v72
    %v369 = vpop.permute.xlu0 %368
    %372 = vset.pattern.permute.xlu0 0
    %373 = vperm.xlu0 %372, %v73
    %v374 = vpop.permute.xlu0 %373
    %377 = vset.pattern.permute.xlu0 0
    %378 = vperm.xlu0 %377, %v74
    %v379 = vpop.permute.xlu0 %378
    %v381 = vmul.f32 %v239, %v304
    %v382 = vmul.f32 %v242, %v309
    %v383 = vmul.f32 %v247, %v314
    %v384 = vmul.f32 %v250, %v319
    %v385 = vmul.f32 %v255, %v324
    %v386 = vmul.f32 %v258, %v329
    %v387 = vmul.f32 %v263, %v334
    %v388 = vmul.f32 %v266, %v339
    %v389 = vmul.f32 %v271, %v344
    %v390 = vmul.f32 %v274, %v349
    %v391 = vmul.f32 %v279, %v354
    %v392 = vmul.f32 %v282, %v359
    %v393 = vmul.f32 %v287, %v364
    %v394 = vmul.f32 %v290, %v369
    %v395 = vmul.f32 %v295, %v374
    %v396 = vmul.f32 %v298, %v379
    %v397 = vpack.c.bf16 %v382, %v381
    %v398 = vpack.c.bf16 %v384, %v383
    %v399 = vpack.c.bf16 %v386, %v385
    %v400 = vpack.c.bf16 %v388, %v387
    %v401 = vpack.c.bf16 %v390, %v389
    %v402 = vpack.c.bf16 %v392, %v391
    %v403 = vpack.c.bf16 %v394, %v393
    %v404 = vpack.c.bf16 %v396, %v395
    %v413 = vunpack.c.l.b16 %v99
    %v414 = vunpack.c.l.b16 %v100
    %v415 = vunpack.c.l.b16 %v101
    %v416 = vunpack.c.l.b16 %v102
    %v417 = vunpack.c.l.b16 %v103
    %v418 = vunpack.c.l.b16 %v104
    %v419 = vunpack.c.l.b16 %v105
    %v420 = vunpack.c.l.b16 %v106
    %v421 = vpack.c.b16 %v414, %v413
    %v422 = vpack.c.b16 %v416, %v415
    %v423 = vpack.c.b16 %v418, %v417
    %v424 = vpack.c.b16 %v420, %v419
    %vm429 = vcmask 523264
    %v431 = vsel %vm429, %v188, 0
    %v434 = vsel %vm429, %v189, 0
    %v437 = vsel %vm429, %v190, 0
    %v440 = vsel %vm429, %v191, 0
    %v443 = vsel %vm429, %v192, 0
    %v446 = vsel %vm429, %v193, 0
    %v449 = vsel %vm429, %v194, 0
    %v452 = vsel %vm429, %v195, 0
    %454 = vmatprep.subr.bf16.mxu0 0
    %455 = vmatpush1.bf16.msra.mxu0 %v421
    %456 = vmatprep.subr.bf16.mxu0 0
    %457 = vmatpush1.bf16.msra.mxu0 %v422
    %458 = vmatprep.subr.bf16.mxu0 0
    %459 = vmatpush1.bf16.msra.mxu0 %v423
    %460 = vmatprep.subr.bf16.mxu0 0
    %461 = vmatpush1.bf16.msra.mxu0 %v424
    %462 = vmatprep.subr.bf16.mxu0 0
    %463 = vmatpush1.bf16.msra.mxu0 0
    %464 = vmatprep.subr.bf16.mxu0 0
    %465 = vmatpush1.bf16.msra.mxu0 0
    %466 = vmatprep.subr.bf16.mxu0 0
    %467 = vmatpush1.bf16.msra.mxu0 0
    %468 = vmatprep.subr.bf16.mxu0 0
    %469 = vmatpush1.bf16.msra.mxu0 0
    %470 = vmatprep.subr.bf16.mxu0 0
    %471 = vmatpush1.bf16.msra.mxu0 0
    %472 = vmatprep.subr.bf16.mxu0 0
    %473 = vmatpush1.bf16.msra.mxu0 0
    %474 = vmatprep.subr.bf16.mxu0 0
    %475 = vmatpush1.bf16.msra.mxu0 0
    %476 = vmatprep.subr.bf16.mxu0 0
    %477 = vmatpush1.bf16.msra.mxu0 0
    %478 = vmatprep.subr.bf16.mxu0 0
    %479 = vmatpush1.bf16.msra.mxu0 0
    %480 = vmatprep.subr.bf16.mxu0 0
    %481 = vmatpush1.bf16.msra.mxu0 0
    %482 = vmatprep.subr.bf16.mxu0 0
    %483 = vmatpush1.bf16.msra.mxu0 0
    %484 = vmatprep.subr.bf16.mxu0 0
    %485 = vmatpush1.bf16.msra.mxu0 0
    %486 = vmatprep.mubr.bf16.mxu0 0
    %487 = vmatmul.mubr.bf16.gmra.mrb[0].mxu0 %v431
    %v488 = vpop.f32.mrb[0].mxu0
    %v489 = vadd.f32 0.0, %v488
    %v490 = vpop.f32.mrb[0].mxu0
    %v491 = vpop.f32.mrb[0].mxu0
    %v492 = vadd.f32 0.0, %v491
    %v493 = vpop.f32.mrb[0].mxu0
    %494 = vmatprep.mubr.bf16.mxu0 0
    %495 = vmatmul.mubr.bf16.gmra.mrb[0].mxu0 %v434
    %v496 = vpop.f32.mrb[0].mxu0
    %v497 = vadd.f32 0.0, %v496
    %v498 = vpop.f32.mrb[0].mxu0
    %v499 = vpop.f32.mrb[0].mxu0
    %v500 = vadd.f32 0.0, %v499
    %v501 = vpop.f32.mrb[0].mxu0
    %502 = vmatprep.mubr.bf16.mxu0 0
    %503 = vmatmul.mubr.bf16.gmra.mrb[0].mxu0 %v437
    %v504 = vpop.f32.mrb[0].mxu0
    %v505 = vadd.f32 0.0, %v504
    %v506 = vpop.f32.mrb[0].mxu0
    %v507 = vpop.f32.mrb[0].mxu0
    %v508 = vadd.f32 0.0, %v507
    %v509 = vpop.f32.mrb[0].mxu0
    %510 = vmatprep.mubr.bf16.mxu0 0
    %511 = vmatmul.mubr.bf16.gmra.mrb[0].mxu0 %v440
    %v512 = vpop.f32.mrb[0].mxu0
    %v513 = vadd.f32 0.0, %v512
    %v514 = vpop.f32.mrb[0].mxu0
    %v515 = vpop.f32.mrb[0].mxu0
    %v516 = vadd.f32 0.0, %v515
    %v517 = vpop.f32.mrb[0].mxu0
    %518 = vmatprep.mubr.bf16.mxu0 0
    %519 = vmatmul.mubr.bf16.gmra.mrb[0].mxu0 %v443
    %v520 = vpop.f32.mrb[0].mxu0
    %v521 = vadd.f32 0.0, %v520
    %v522 = vpop.f32.mrb[0].mxu0
    %v523 = vpop.f32.mrb[0].mxu0
    %v524 = vadd.f32 0.0, %v523
    %v525 = vpop.f32.mrb[0].mxu0
    %526 = vmatprep.mubr.bf16.mxu0 0
    %527 = vmatmul.mubr.bf16.gmra.mrb[0].mxu0 %v446
    %v528 = vpop.f32.mrb[0].mxu0
    %v529 = vadd.f32 0.0, %v528
    %v530 = vpop.f32.mrb[0].mxu0
    %v531 = vpop.f32.mrb[0].mxu0
    %v532 = vadd.f32 0.0, %v531
    %v533 = vpop.f32.mrb[0].mxu0
    %534 = vmatprep.mubr.bf16.mxu0 0
    %535 = vmatmul.mubr.bf16.gmra.mrb[0].mxu0 %v449
    %v536 = vpop.f32.mrb[0].mxu0
    %v537 = vadd.f32 0.0, %v536
    %v538 = vpop.f32.mrb[0].mxu0
    %v539 = vpop.f32.mrb[0].mxu0
    %v540 = vadd.f32 0.0, %v539
    %v541 = vpop.f32.mrb[0].mxu0
    %542 = vmatprep.mubr.bf16.mxu0 0
    %543 = vmatmul.mubr.bf16.gmra.mrb[0].mxu0 %v452
    %v544 = vpop.f32.mrb[0].mxu0
    %v545 = vadd.f32 0.0, %v544
    %v546 = vpop.f32.mrb[0].mxu0
    %v547 = vpop.f32.mrb[0].mxu0
    %v548 = vadd.f32 0.0, %v547
    %v549 = vpop.f32.mrb[0].mxu0
    %550 = vdwg.mxu0
    %v559 = vunpack.c.l.b16 %v91
    %v560 = vunpack.c.l.b16 %v92
    %v561 = vunpack.c.l.b16 %v93
    %v562 = vunpack.c.l.b16 %v94
    %v563 = vunpack.c.l.b16 %v95
    %v564 = vunpack.c.l.b16 %v96
    %v565 = vunpack.c.l.b16 %v97
    %v566 = vunpack.c.l.b16 %v98
    %v567 = vpack.c.b16 %v560, %v559
    %v568 = vpack.c.b16 %v562, %v561
    %v569 = vpack.c.b16 %v564, %v563
    %v570 = vpack.c.b16 %v566, %v565
    %v576 = vsel %vm429, %v397, 0
    %v579 = vsel %vm429, %v398, 0
    %v582 = vsel %vm429, %v399, 0
    %v585 = vsel %vm429, %v400, 0
    %v588 = vsel %vm429, %v401, 0
    %v591 = vsel %vm429, %v402, 0
    %v594 = vsel %vm429, %v403, 0
    %v597 = vsel %vm429, %v404, 0
    %599 = vmatprep.subr.bf16.mxu0 0
    %600 = vmatpush1.bf16.msra.mxu0 %v567
    %601 = vmatprep.subr.bf16.mxu0 0
    %602 = vmatpush1.bf16.msra.mxu0 %v568
    %603 = vmatprep.subr.bf16.mxu0 0
    %604 = vmatpush1.bf16.msra.mxu0 %v569
    %605 = vmatprep.subr.bf16.mxu0 0
    %606 = vmatpush1.bf16.msra.mxu0 %v570
    %607 = vmatprep.subr.bf16.mxu0 0
    %608 = vmatpush1.bf16.msra.mxu0 0
    %609 = vmatprep.subr.bf16.mxu0 0
    %610 = vmatpush1.bf16.msra.mxu0 0
    %611 = vmatprep.subr.bf16.mxu0 0
    %612 = vmatpush1.bf16.msra.mxu0 0
    %613 = vmatprep.subr.bf16.mxu0 0
    %614 = vmatpush1.bf16.msra.mxu0 0
    %615 = vmatprep.subr.bf16.mxu0 0
    %616 = vmatpush1.bf16.msra.mxu0 0
    %617 = vmatprep.subr.bf16.mxu0 0
    %618 = vmatpush1.bf16.msra.mxu0 0
    %619 = vmatprep.subr.bf16.mxu0 0
    %620 = vmatpush1.bf16.msra.mxu0 0
    %621 = vmatprep.subr.bf16.mxu0 0
    %622 = vmatpush1.bf16.msra.mxu0 0
    %623 = vmatprep.subr.bf16.mxu0 0
    %624 = vmatpush1.bf16.msra.mxu0 0
    %625 = vmatprep.subr.bf16.mxu0 0
    %626 = vmatpush1.bf16.msra.mxu0 0
    %627 = vmatprep.subr.bf16.mxu0 0
    %628 = vmatpush1.bf16.msra.mxu0 0
    %629 = vmatprep.subr.bf16.mxu0 0
    %630 = vmatpush1.bf16.msra.mxu0 0
    %631 = vmatprep.mubr.bf16.mxu0 0
    %632 = vmatmul.mubr.bf16.gmra.mrb[0].mxu0 %v576
    %v633 = vpop.f32.mrb[0].mxu0
    %v634 = vadd.f32 %v489, %v633
    %v635 = vpop.f32.mrb[0].mxu0
    %v636 = vpop.f32.mrb[0].mxu0
    %v637 = vadd.f32 %v492, %v636
    %v638 = vpop.f32.mrb[0].mxu0
    %639 = vmatprep.mubr.bf16.mxu0 0
    %640 = vmatmul.mubr.bf16.gmra.mrb[0].mxu0 %v579
    %v641 = vpop.f32.mrb[0].mxu0
    %v642 = vadd.f32 %v497, %v641
    %v643 = vpop.f32.mrb[0].mxu0
    %v644 = vpop.f32.mrb[0].mxu0
    %v645 = vadd.f32 %v500, %v644
    %v646 = vpop.f32.mrb[0].mxu0
    %647 = vmatprep.mubr.bf16.mxu0 0
    %648 = vmatmul.mubr.bf16.gmra.mrb[0].mxu0 %v582
    %v649 = vpop.f32.mrb[0].mxu0
    %v650 = vadd.f32 %v505, %v649
    %v651 = vpop.f32.mrb[0].mxu0
    %v652 = vpop.f32.mrb[0].mxu0
    %v653 = vadd.f32 %v508, %v652
    %v654 = vpop.f32.mrb[0].mxu0
    %655 = vmatprep.mubr.bf16.mxu0 0
    %656 = vmatmul.mubr.bf16.gmra.mrb[0].mxu0 %v585
    %v657 = vpop.f32.mrb[0].mxu0
    %v658 = vadd.f32 %v513, %v657
    %v659 = vpop.f32.mrb[0].mxu0
    %v660 = vpop.f32.mrb[0].mxu0
    %v661 = vadd.f32 %v516, %v660
    %v662 = vpop.f32.mrb[0].mxu0
    %663 = vmatprep.mubr.bf16.mxu0 0
    %664 = vmatmul.mubr.bf16.gmra.mrb[0].mxu0 %v588
    %v665 = vpop.f32.mrb[0].mxu0
    %v666 = vadd.f32 %v521, %v665
    %v667 = vpop.f32.mrb[0].mxu0
    %v668 = vpop.f32.mrb[0].mxu0
    %v669 = vadd.f32 %v524, %v668
    %v670 = vpop.f32.mrb[0].mxu0
    %671 = vmatprep.mubr.bf16.mxu0 0
    %672 = vmatmul.mubr.bf16.gmra.mrb[0].mxu0 %v591
    %v673 = vpop.f32.mrb[0].mxu0
    %v674 = vadd.f32 %v529, %v673
    %v675 = vpop.f32.mrb[0].mxu0
    %v676 = vpop.f32.mrb[0].mxu0
    %v677 = vadd.f32 %v532, %v676
    %v678 = vpop.f32.mrb[0].mxu0
    %679 = vmatprep.mubr.bf16.mxu0 0
    %680 = vmatmul.mubr.bf16.gmra.mrb[0].mxu0 %v594
    %v681 = vpop.f32.mrb[0].mxu0
    %v682 = vadd.f32 %v537, %v681
    %v683 = vpop.f32.mrb[0].mxu0
    %v684 = vpop.f32.mrb[0].mxu0
    %v685 = vadd.f32 %v540, %v684
    %v686 = vpop.f32.mrb[0].mxu0
    %687 = vmatprep.mubr.bf16.mxu0 0
    %688 = vmatmul.mubr.bf16.gmra.mrb[0].mxu0 %v597
    %v689 = vpop.f32.mrb[0].mxu0
    %v690 = vadd.f32 %v545, %v689
    %v691 = vpop.f32.mrb[0].mxu0
    %v692 = vpop.f32.mrb[0].mxu0
    %v693 = vadd.f32 %v548, %v692
    %v694 = vpop.f32.mrb[0].mxu0
    %695 = vdwg.mxu0
    %v697 = vlaneseq
    %v698 = vshrl.u32 %v697, 7
    %v699 = vsub.s32 0, %v698
    %v700 = vrot.slane %v107, %v699
    %v702 = vadd.f32 %v634, %v700
    %v703 = vadd.f32 %v637, %v700
    %v704 = vadd.f32 %v642, %v700
    %v705 = vadd.f32 %v645, %v700
    %v706 = vadd.f32 %v650, %v700
    %v707 = vadd.f32 %v653, %v700
    %v708 = vadd.f32 %v658, %v700
    %v709 = vadd.f32 %v661, %v700
    %v710 = vadd.f32 %v666, %v700
    %v711 = vadd.f32 %v669, %v700
    %v712 = vadd.f32 %v674, %v700
    %v713 = vadd.f32 %v677, %v700
    %v714 = vadd.f32 %v682, %v700
    %v715 = vadd.f32 %v685, %v700
    %v716 = vadd.f32 %v690, %v700
    %v717 = vadd.f32 %v693, %v700
    %v718 = vmax.f32 %v702, 0.0
    %v719 = vmax.f32 %v703, 0.0
    %v720 = vmax.f32 %v704, 0.0
    %v721 = vmax.f32 %v705, 0.0
    %v722 = vmax.f32 %v706, 0.0
    %v723 = vmax.f32 %v707, 0.0
    %v724 = vmax.f32 %v708, 0.0
    %v725 = vmax.f32 %v709, 0.0
    %v726 = vmax.f32 %v710, 0.0
    %v727 = vmax.f32 %v711, 0.0
    %v728 = vmax.f32 %v712, 0.0
    %v729 = vmax.f32 %v713, 0.0
    %v730 = vmax.f32 %v714, 0.0
    %v731 = vmax.f32 %v715, 0.0
    %v732 = vmax.f32 %v716, 0.0
    %v733 = vmax.f32 %v717, 0.0
    %v734 = vpack.c.bf16 %v719, %v718
    %v735 = vpack.c.bf16 %v721, %v720
    %v736 = vpack.c.bf16 %v723, %v722
    %v737 = vpack.c.bf16 %v725, %v724
    %v738 = vpack.c.bf16 %v727, %v726
    %v739 = vpack.c.bf16 %v729, %v728
    %v740 = vpack.c.bf16 %v731, %v730
    %v741 = vpack.c.bf16 %v733, %v732
    %v742 = vld [vmem:[%s6] sm:$0xf]
    %v743 = vld [vmem:[%s6 + $0x4] sm:$0xf]
    %v744 = vld [vmem:[%s6 + $0x8] sm:$0xf]
    %v745 = vld [vmem:[%s6 + $0xc] sm:$0xf]
    %v746 = vld [vmem:[%s6 + $0x10] sm:$0xf]
    %v747 = vld [vmem:[%s6 + $0x14] sm:$0xf]
    %v748 = vld [vmem:[%s6 + $0x18] sm:$0xf]
    %v749 = vld [vmem:[%s6 + $0x1c] sm:$0xf]
    %v750 = vld [vmem:[%s7] sm:$0xf]
    %v751 = vld [vmem:[%s7 + $0x4] sm:$0xf]
    %v752 = vld [vmem:[%s7 + $0x8] sm:$0xf]
    %v753 = vld [vmem:[%s7 + $0xc] sm:$0xf]
    %v754 = vld [vmem:[%s7 + $0x10] sm:$0xf]
    %v755 = vld [vmem:[%s7 + $0x14] sm:$0xf]
    %v756 = vld [vmem:[%s7 + $0x18] sm:$0xf]
    %v757 = vld [vmem:[%s7 + $0x1c] sm:$0xf]
    %v758 = vld [vmem:[%s8] sm:$0x1]
    %759 = vmatprep.subr.bf16.mxu0 0
    %760 = vmatpush1.bf16.msra.mxu0 %v734
    %761 = vmatprep.subr.bf16.mxu0 0
    %762 = vmatpush1.bf16.msra.mxu0 %v735
    %763 = vmatprep.subr.bf16.mxu0 0
    %764 = vmatpush1.bf16.msra.mxu0 %v736
    %765 = vmatprep.subr.bf16.mxu0 0
    %766 = vmatpush1.bf16.msra.mxu0 %v737
    %767 = vmatprep.subr.bf16.mxu0 0
    %768 = vmatpush1.bf16.msra.mxu0 %v738
    %769 = vmatprep.subr.bf16.mxu0 0
    %770 = vmatpush1.bf16.msra.mxu0 %v739
    %771 = vmatprep.subr.bf16.mxu0 0
    %772 = vmatpush1.bf16.msra.mxu0 %v740
    %773 = vmatprep.subr.bf16.mxu0 0
    %774 = vmatpush1.bf16.msra.mxu0 %v741
    %775 = vmatprep.subr.bf16.mxu0 0
    %776 = vmatpush1.bf16.msra.mxu0 0
    %777 = vmatprep.subr.bf16.mxu0 0
    %778 = vmatpush1.bf16.msra.mxu0 0
    %779 = vmatprep.subr.bf16.mxu0 0
    %780 = vmatpush1.bf16.msra.mxu0 0
    %781 = vmatprep.subr.bf16.mxu0 0
    %782 = vmatpush1.bf16.msra.mxu0 0
    %783 = vmatprep.subr.bf16.mxu0 0
    %784 = vmatpush1.bf16.msra.mxu0 0
    %785 = vmatprep.subr.bf16.mxu0 0
    %786 = vmatpush1.bf16.msra.mxu0 0
    %787 = vmatprep.subr.bf16.mxu0 0
    %788 = vmatpush1.bf16.msra.mxu0 0
    %789 = vmatprep.subr.bf16.mxu0 0
    %790 = vmatpush1.bf16.msra.mxu0 0
    %791 = vmatprep.mubr.bf16.mxu0 0
    %792 = vmatmul.mubr.bf16.gmra.mrb[0].mxu0 %v140
    %v793 = vpop.f32.mrb[0].mxu0
    %v794 = vadd.f32 0.0, %v793
    %v795 = vpop.f32.mrb[0].mxu0
    %v796 = vpop.f32.mrb[0].mxu0
    %v797 = vadd.f32 0.0, %v796
    %v798 = vpop.f32.mrb[0].mxu0
    %799 = vmatprep.mubr.bf16.mxu0 0
    %800 = vmatmul.mubr.bf16.gmra.mrb[0].mxu0 %v141
    %v801 = vpop.f32.mrb[0].mxu0
    %v802 = vadd.f32 0.0, %v801
    %v803 = vpop.f32.mrb[0].mxu0
    %v804 = vpop.f32.mrb[0].mxu0
    %v805 = vadd.f32 0.0, %v804
    %v806 = vpop.f32.mrb[0].mxu0
    %807 = vmatprep.mubr.bf16.mxu0 0
    %808 = vmatmul.mubr.bf16.gmra.mrb[0].mxu0 %v142
    %v809 = vpop.f32.mrb[0].mxu0
    %v810 = vadd.f32 0.0, %v809
    %v811 = vpop.f32.mrb[0].mxu0
    %v812 = vpop.f32.mrb[0].mxu0
    %v813 = vadd.f32 0.0, %v812
    %v814 = vpop.f32.mrb[0].mxu0
    %815 = vmatprep.mubr.bf16.mxu0 0
    %816 = vmatmul.mubr.bf16.gmra.mrb[0].mxu0 %v143
    %v817 = vpop.f32.mrb[0].mxu0
    %v818 = vadd.f32 0.0, %v817
    %v819 = vpop.f32.mrb[0].mxu0
    %v820 = vpop.f32.mrb[0].mxu0
    %v821 = vadd.f32 0.0, %v820
    %v822 = vpop.f32.mrb[0].mxu0
    %823 = vmatprep.mubr.bf16.mxu0 0
    %824 = vmatmul.mubr.bf16.gmra.mrb[0].mxu0 %v144
    %v825 = vpop.f32.mrb[0].mxu0
    %v826 = vadd.f32 0.0, %v825
    %v827 = vpop.f32.mrb[0].mxu0
    %v828 = vpop.f32.mrb[0].mxu0
    %v829 = vadd.f32 0.0, %v828
    %v830 = vpop.f32.mrb[0].mxu0
    %831 = vmatprep.mubr.bf16.mxu0 0
    %832 = vmatmul.mubr.bf16.gmra.mrb[0].mxu0 %v145
    %v833 = vpop.f32.mrb[0].mxu0
    %v834 = vadd.f32 0.0, %v833
    %v835 = vpop.f32.mrb[0].mxu0
    %v836 = vpop.f32.mrb[0].mxu0
    %v837 = vadd.f32 0.0, %v836
    %v838 = vpop.f32.mrb[0].mxu0
    %839 = vmatprep.mubr.bf16.mxu0 0
    %840 = vmatmul.mubr.bf16.gmra.mrb[0].mxu0 %v146
    %v841 = vpop.f32.mrb[0].mxu0
    %v842 = vadd.f32 0.0, %v841
    %v843 = vpop.f32.mrb[0].mxu0
    %v844 = vpop.f32.mrb[0].mxu0
    %v845 = vadd.f32 0.0, %v844
    %v846 = vpop.f32.mrb[0].mxu0
    %847 = vmatprep.mubr.bf16.mxu0 0
    %848 = vmatmul.mubr.bf16.gmra.mrb[0].mxu0 %v147
    %v849 = vpop.f32.mrb[0].mxu0
    %v850 = vadd.f32 0.0, %v849
    %v851 = vpop.f32.mrb[0].mxu0
    %v852 = vpop.f32.mrb[0].mxu0
    %v853 = vadd.f32 0.0, %v852
    %v854 = vpop.f32.mrb[0].mxu0
    %855 = vdwg.mxu0
    %v856 = vmul.f32 %v794, %v304
    %v857 = vmul.f32 %v797, %v309
    %v858 = vmul.f32 %v802, %v314
    %v859 = vmul.f32 %v805, %v319
    %v860 = vmul.f32 %v810, %v324
    %v861 = vmul.f32 %v813, %v329
    %v862 = vmul.f32 %v818, %v334
    %v863 = vmul.f32 %v821, %v339
    %v864 = vmul.f32 %v826, %v344
    %v865 = vmul.f32 %v829, %v349
    %v866 = vmul.f32 %v834, %v354
    %v867 = vmul.f32 %v837, %v359
    %v868 = vmul.f32 %v842, %v364
    %v869 = vmul.f32 %v845, %v369
    %v870 = vmul.f32 %v850, %v374
    %v871 = vmul.f32 %v853, %v379
    %v872 = vpack.c.bf16 %v857, %v856
    %v873 = vpack.c.bf16 %v859, %v858
    %v874 = vpack.c.bf16 %v861, %v860
    %v875 = vpack.c.bf16 %v863, %v862
    %v876 = vpack.c.bf16 %v865, %v864
    %v877 = vpack.c.bf16 %v867, %v866
    %v878 = vpack.c.bf16 %v869, %v868
    %v879 = vpack.c.bf16 %v871, %v870
    %v888 = vunpack.c.l.b16 %v750
    %v889 = vunpack.c.l.b16 %v751
    %v890 = vunpack.c.l.b16 %v752
    %v891 = vunpack.c.l.b16 %v753
    %v892 = vunpack.c.l.b16 %v754
    %v893 = vunpack.c.l.b16 %v755
    %v894 = vunpack.c.l.b16 %v756
    %v895 = vunpack.c.l.b16 %v757
    %v896 = vpack.c.b16 %v889, %v888
    %v897 = vpack.c.b16 %v891, %v890
    %v898 = vpack.c.b16 %v893, %v892
    %v899 = vpack.c.b16 %v895, %v894
    %v905 = vsel %vm429, %v734, 0
    %v908 = vsel %vm429, %v735, 0
    %v911 = vsel %vm429, %v736, 0
    %v914 = vsel %vm429, %v737, 0
    %v917 = vsel %vm429, %v738, 0
    %v920 = vsel %vm429, %v739, 0
    %v923 = vsel %vm429, %v740, 0
    %v926 = vsel %vm429, %v741, 0
    %928 = vmatprep.subr.bf16.mxu0 0
    %929 = vmatpush1.bf16.msra.mxu0 %v896
    %930 = vmatprep.subr.bf16.mxu0 0
    %931 = vmatpush1.bf16.msra.mxu0 %v897
    %932 = vmatprep.subr.bf16.mxu0 0
    %933 = vmatpush1.bf16.msra.mxu0 %v898
    %934 = vmatprep.subr.bf16.mxu0 0
    %935 = vmatpush1.bf16.msra.mxu0 %v899
    %936 = vmatprep.subr.bf16.mxu0 0
    %937 = vmatpush1.bf16.msra.mxu0 0
    %938 = vmatprep.subr.bf16.mxu0 0
    %939 = vmatpush1.bf16.msra.mxu0 0
    %940 = vmatprep.subr.bf16.mxu0 0
    %941 = vmatpush1.bf16.msra.mxu0 0
    %942 = vmatprep.subr.bf16.mxu0 0
    %943 = vmatpush1.bf16.msra.mxu0 0
    %944 = vmatprep.subr.bf16.mxu0 0
    %945 = vmatpush1.bf16.msra.mxu0 0
    %946 = vmatprep.subr.bf16.mxu0 0
    %947 = vmatpush1.bf16.msra.mxu0 0
    %948 = vmatprep.subr.bf16.mxu0 0
    %949 = vmatpush1.bf16.msra.mxu0 0
    %950 = vmatprep.subr.bf16.mxu0 0
    %951 = vmatpush1.bf16.msra.mxu0 0
    %952 = vmatprep.subr.bf16.mxu0 0
    %953 = vmatpush1.bf16.msra.mxu0 0
    %954 = vmatprep.subr.bf16.mxu0 0
    %955 = vmatpush1.bf16.msra.mxu0 0
    %956 = vmatprep.subr.bf16.mxu0 0
    %957 = vmatpush1.bf16.msra.mxu0 0
    %958 = vmatprep.subr.bf16.mxu0 0
    %959 = vmatpush1.bf16.msra.mxu0 0
    %960 = vmatprep.mubr.bf16.mxu0 0
    %961 = vmatmul.mubr.bf16.gmra.mrb[0].mxu0 %v905
    %v962 = vpop.f32.mrb[0].mxu0
    %v963 = vadd.f32 0.0, %v962
    %v964 = vpop.f32.mrb[0].mxu0
    %v965 = vpop.f32.mrb[0].mxu0
    %v966 = vadd.f32 0.0, %v965
    %v967 = vpop.f32.mrb[0].mxu0
    %968 = vmatprep.mubr.bf16.mxu0 0
    %969 = vmatmul.mubr.bf16.gmra.mrb[0].mxu0 %v908
    %v970 = vpop.f32.mrb[0].mxu0
    %v971 = vadd.f32 0.0, %v970
    %v972 = vpop.f32.mrb[0].mxu0
    %v973 = vpop.f32.mrb[0].mxu0
    %v974 = vadd.f32 0.0, %v973
    %v975 = vpop.f32.mrb[0].mxu0
    %976 = vmatprep.mubr.bf16.mxu0 0
    %977 = vmatmul.mubr.bf16.gmra.mrb[0].mxu0 %v911
    %v978 = vpop.f32.mrb[0].mxu0
    %v979 = vadd.f32 0.0, %v978
    %v980 = vpop.f32.mrb[0].mxu0
    %v981 = vpop.f32.mrb[0].mxu0
    %v982 = vadd.f32 0.0, %v981
    %v983 = vpop.f32.mrb[0].mxu0
    %984 = vmatprep.mubr.bf16.mxu0 0
    %985 = vmatmul.mubr.bf16.gmra.mrb[0].mxu0 %v914
    %v986 = vpop.f32.mrb[0].mxu0
    %v987 = vadd.f32 0.0, %v986
    %v988 = vpop.f32.mrb[0].mxu0
    %v989 = vpop.f32.mrb[0].mxu0
    %v990 = vadd.f32 0.0, %v989
    %v991 = vpop.f32.mrb[0].mxu0
    %992 = vmatprep.mubr.bf16.mxu0 0
    %993 = vmatmul.mubr.bf16.gmra.mrb[0].mxu0 %v917
    %v994 = vpop.f32.mrb[0].mxu0
    %v995 = vadd.f32 0.0, %v994
    %v996 = vpop.f32.mrb[0].mxu0
    %v997 = vpop.f32.mrb[0].mxu0
    %v998 = vadd.f32 0.0, %v997
    %v999 = vpop.f32.mrb[0].mxu0
    %1000 = vmatprep.mubr.bf16.mxu0 0
    %1001 = vmatmul.mubr.bf16.gmra.mrb[0].mxu0 %v920
    %v1002 = vpop.f32.mrb[0].mxu0
    %v1003 = vadd.f32 0.0, %v1002
    %v1004 = vpop.f32.mrb[0].mxu0
    %v1005 = vpop.f32.mrb[0].mxu0
    %v1006 = vadd.f32 0.0, %v1005
    %v1007 = vpop.f32.mrb[0].mxu0
    %1008 = vmatprep.mubr.bf16.mxu0 0
    %1009 = vmatmul.mubr.bf16.gmra.mrb[0].mxu0 %v923
    %v1010 = vpop.f32.mrb[0].mxu0
    %v1011 = vadd.f32 0.0, %v1010
    %v1012 = vpop.f32.mrb[0].mxu0
    %v1013 = vpop.f32.mrb[0].mxu0
    %v1014 = vadd.f32 0.0, %v1013
    %v1015 = vpop.f32.mrb[0].mxu0
    %1016 = vmatprep.mubr.bf16.mxu0 0
    %1017 = vmatmul.mubr.bf16.gmra.mrb[0].mxu0 %v926
    %v1018 = vpop.f32.mrb[0].mxu0
    %v1019 = vadd.f32 0.0, %v1018
    %v1020 = vpop.f32.mrb[0].mxu0
    %v1021 = vpop.f32.mrb[0].mxu0
    %v1022 = vadd.f32 0.0, %v1021
    %v1023 = vpop.f32.mrb[0].mxu0
    %1024 = vdwg.mxu0
    %v1033 = vunpack.c.l.b16 %v742
    %v1034 = vunpack.c.l.b16 %v743
    %v1035 = vunpack.c.l.b16 %v744
    %v1036 = vunpack.c.l.b16 %v745
    %v1037 = vunpack.c.l.b16 %v746
    %v1038 = vunpack.c.l.b16 %v747
    %v1039 = vunpack.c.l.b16 %v748
    %v1040 = vunpack.c.l.b16 %v749
    %v1041 = vpack.c.b16 %v1034, %v1033
    %v1042 = vpack.c.b16 %v1036, %v1035
    %v1043 = vpack.c.b16 %v1038, %v1037
    %v1044 = vpack.c.b16 %v1040, %v1039
    %v1050 = vsel %vm429, %v872, 0
    %v1053 = vsel %vm429, %v873, 0
    %v1056 = vsel %vm429, %v874, 0
    %v1059 = vsel %vm429, %v875, 0
    %v1062 = vsel %vm429, %v876, 0
    %v1065 = vsel %vm429, %v877, 0
    %v1068 = vsel %vm429, %v878, 0
    %v1071 = vsel %vm429, %v879, 0
    %1073 = vmatprep.subr.bf16.mxu0 0
    %1074 = vmatpush1.bf16.msra.mxu0 %v1041
    %1075 = vmatprep.subr.bf16.mxu0 0
    %1076 = vmatpush1.bf16.msra.mxu0 %v1042
    %1077 = vmatprep.subr.bf16.mxu0 0
    %1078 = vmatpush1.bf16.msra.mxu0 %v1043
    %1079 = vmatprep.subr.bf16.mxu0 0
    %1080 = vmatpush1.bf16.msra.mxu0 %v1044
    %1081 = vmatprep.subr.bf16.mxu0 0
    %1082 = vmatpush1.bf16.msra.mxu0 0
    %1083 = vmatprep.subr.bf16.mxu0 0
    %1084 = vmatpush1.bf16.msra.mxu0 0
    %1085 = vmatprep.subr.bf16.mxu0 0
    %1086 = vmatpush1.bf16.msra.mxu0 0
    %1087 = vmatprep.subr.bf16.mxu0 0
    %1088 = vmatpush1.bf16.msra.mxu0 0
    %1089 = vmatprep.subr.bf16.mxu0 0
    %1090 = vmatpush1.bf16.msra.mxu0 0
    %1091 = vmatprep.subr.bf16.mxu0 0
    %1092 = vmatpush1.bf16.msra.mxu0 0
    %1093 = vmatprep.subr.bf16.mxu0 0
    %1094 = vmatpush1.bf16.msra.mxu0 0
    %1095 = vmatprep.subr.bf16.mxu0 0
    %1096 = vmatpush1.bf16.msra.mxu0 0
    %1097 = vmatprep.subr.bf16.mxu0 0
    %1098 = vmatpush1.bf16.msra.mxu0 0
    %1099 = vmatprep.subr.bf16.mxu0 0
    %1100 = vmatpush1.bf16.msra.mxu0 0
    %1101 = vmatprep.subr.bf16.mxu0 0
    %1102 = vmatpush1.bf16.msra.mxu0 0
    %1103 = vmatprep.subr.bf16.mxu0 0
    %1104 = vmatpush1.bf16.msra.mxu0 0
    %1105 = vmatprep.mubr.bf16.mxu0 0
    %1106 = vmatmul.mubr.bf16.gmra.mrb[0].mxu0 %v1050
    %v1107 = vpop.f32.mrb[0].mxu0
    %v1108 = vadd.f32 %v963, %v1107
    %v1109 = vpop.f32.mrb[0].mxu0
    %v1110 = vpop.f32.mrb[0].mxu0
    %v1111 = vadd.f32 %v966, %v1110
    %v1112 = vpop.f32.mrb[0].mxu0
    %1113 = vmatprep.mubr.bf16.mxu0 0
    %1114 = vmatmul.mubr.bf16.gmra.mrb[0].mxu0 %v1053
    %v1115 = vpop.f32.mrb[0].mxu0
    %v1116 = vadd.f32 %v971, %v1115
    %v1117 = vpop.f32.mrb[0].mxu0
    %v1118 = vpop.f32.mrb[0].mxu0
    %v1119 = vadd.f32 %v974, %v1118
    %v1120 = vpop.f32.mrb[0].mxu0
    %1121 = vmatprep.mubr.bf16.mxu0 0
    %1122 = vmatmul.mubr.bf16.gmra.mrb[0].mxu0 %v1056
    %v1123 = vpop.f32.mrb[0].mxu0
    %v1124 = vadd.f32 %v979, %v1123
    %v1125 = vpop.f32.mrb[0].mxu0
    %v1126 = vpop.f32.mrb[0].mxu0
    %v1127 = vadd.f32 %v982, %v1126
    %v1128 = vpop.f32.mrb[0].mxu0
    %1129 = vmatprep.mubr.bf16.mxu0 0
    %1130 = vmatmul.mubr.bf16.gmra.mrb[0].mxu0 %v1059
    %v1131 = vpop.f32.mrb[0].mxu0
    %v1132 = vadd.f32 %v987, %v1131
    %v1133 = vpop.f32.mrb[0].mxu0
    %v1134 = vpop.f32.mrb[0].mxu0
    %v1135 = vadd.f32 %v990, %v1134
    %v1136 = vpop.f32.mrb[0].mxu0
    %1137 = vmatprep.mubr.bf16.mxu0 0
    %1138 = vmatmul.mubr.bf16.gmra.mrb[0].mxu0 %v1062
    %v1139 = vpop.f32.mrb[0].mxu0
    %v1140 = vadd.f32 %v995, %v1139
    %v1141 = vpop.f32.mrb[0].mxu0
    %v1142 = vpop.f32.mrb[0].mxu0
    %v1143 = vadd.f32 %v998, %v1142
    %v1144 = vpop.f32.mrb[0].mxu0
    %1145 = vmatprep.mubr.bf16.mxu0 0
    %1146 = vmatmul.mubr.bf16.gmra.mrb[0].mxu0 %v1065
    %v1147 = vpop.f32.mrb[0].mxu0
    %v1148 = vadd.f32 %v1003, %v1147
    %v1149 = vpop.f32.mrb[0].mxu0
    %v1150 = vpop.f32.mrb[0].mxu0
    %v1151 = vadd.f32 %v1006, %v1150
    %v1152 = vpop.f32.mrb[0].mxu0
    %1153 = vmatprep.mubr.bf16.mxu0 0
    %1154 = vmatmul.mubr.bf16.gmra.mrb[0].mxu0 %v1068
    %v1155 = vpop.f32.mrb[0].mxu0
    %v1156 = vadd.f32 %v1011, %v1155
    %v1157 = vpop.f32.mrb[0].mxu0
    %v1158 = vpop.f32.mrb[0].mxu0
    %v1159 = vadd.f32 %v1014, %v1158
    %v1160 = vpop.f32.mrb[0].mxu0
    %1161 = vmatprep.mubr.bf16.mxu0 0
    %1162 = vmatmul.mubr.bf16.gmra.mrb[0].mxu0 %v1071
    %v1163 = vpop.f32.mrb[0].mxu0
    %v1164 = vadd.f32 %v1019, %v1163
    %v1165 = vpop.f32.mrb[0].mxu0
    %v1166 = vpop.f32.mrb[0].mxu0
    %v1167 = vadd.f32 %v1022, %v1166
    %v1168 = vpop.f32.mrb[0].mxu0
    %1169 = vdwg.mxu0
    %v1171 = vlaneseq
    %v1172 = vshrl.u32 %v1171, 7
    %v1173 = vsub.s32 0, %v1172
    %v1174 = vrot.slane %v758, %v1173
    %v1176 = vadd.f32 %v1108, %v1174
    %v1177 = vadd.f32 %v1111, %v1174
    %v1178 = vadd.f32 %v1116, %v1174
    %v1179 = vadd.f32 %v1119, %v1174
    %v1180 = vadd.f32 %v1124, %v1174
    %v1181 = vadd.f32 %v1127, %v1174
    %v1182 = vadd.f32 %v1132, %v1174
    %v1183 = vadd.f32 %v1135, %v1174
    %v1184 = vadd.f32 %v1140, %v1174
    %v1185 = vadd.f32 %v1143, %v1174
    %v1186 = vadd.f32 %v1148, %v1174
    %v1187 = vadd.f32 %v1151, %v1174
    %v1188 = vadd.f32 %v1156, %v1174
    %v1189 = vadd.f32 %v1159, %v1174
    %v1190 = vadd.f32 %v1164, %v1174
    %v1191 = vadd.f32 %v1167, %v1174
    %v1192 = vmax.f32 %v1176, 0.0
    %v1193 = vmax.f32 %v1177, 0.0
    %v1194 = vmax.f32 %v1178, 0.0
    %v1195 = vmax.f32 %v1179, 0.0
    %v1196 = vmax.f32 %v1180, 0.0
    %v1197 = vmax.f32 %v1181, 0.0
    %v1198 = vmax.f32 %v1182, 0.0
    %v1199 = vmax.f32 %v1183, 0.0
    %v1200 = vmax.f32 %v1184, 0.0
    %v1201 = vmax.f32 %v1185, 0.0
    %v1202 = vmax.f32 %v1186, 0.0
    %v1203 = vmax.f32 %v1187, 0.0
    %v1204 = vmax.f32 %v1188, 0.0
    %v1205 = vmax.f32 %v1189, 0.0
    %v1206 = vmax.f32 %v1190, 0.0
    %v1207 = vmax.f32 %v1191, 0.0
    %v1208 = vpack.c.bf16 %v1193, %v1192
    %v1209 = vpack.c.bf16 %v1195, %v1194
    %v1210 = vpack.c.bf16 %v1197, %v1196
    %v1211 = vpack.c.bf16 %v1199, %v1198
    %v1212 = vpack.c.bf16 %v1201, %v1200
    %v1213 = vpack.c.bf16 %v1203, %v1202
    %v1214 = vpack.c.bf16 %v1205, %v1204
    %v1215 = vpack.c.bf16 %v1207, %v1206
    %v1216 = vld [vmem:[%s9] sm:$0xf]
    %v1217 = vld [vmem:[%s9 + $0x4] sm:$0xf]
    %v1218 = vld [vmem:[%s9 + $0x8] sm:$0xf]
    %v1219 = vld [vmem:[%s9 + $0xc] sm:$0xf]
    %v1220 = vld [vmem:[%s9 + $0x10] sm:$0xf]
    %v1221 = vld [vmem:[%s9 + $0x14] sm:$0xf]
    %v1222 = vld [vmem:[%s9 + $0x18] sm:$0xf]
    %v1223 = vld [vmem:[%s9 + $0x1c] sm:$0xf]
    %v1224 = vld [vmem:[%s10] sm:$0xf]
    %v1225 = vld [vmem:[%s10 + $0x4] sm:$0xf]
    %v1226 = vld [vmem:[%s10 + $0x8] sm:$0xf]
    %v1227 = vld [vmem:[%s10 + $0xc] sm:$0xf]
    %v1228 = vld [vmem:[%s10 + $0x10] sm:$0xf]
    %v1229 = vld [vmem:[%s10 + $0x14] sm:$0xf]
    %v1230 = vld [vmem:[%s10 + $0x18] sm:$0xf]
    %v1231 = vld [vmem:[%s10 + $0x1c] sm:$0xf]
    %v1232 = vld [vmem:[%s11] sm:$0x1]
    %1233 = vmatprep.subr.bf16.mxu0 0
    %1234 = vmatpush1.bf16.msra.mxu0 %v1208
    %1235 = vmatprep.subr.bf16.mxu0 0
    %1236 = vmatpush1.bf16.msra.mxu0 %v1209
    %1237 = vmatprep.subr.bf16.mxu0 0
    %1238 = vmatpush1.bf16.msra.mxu0 %v1210
    %1239 = vmatprep.subr.bf16.mxu0 0
    %1240 = vmatpush1.bf16.msra.mxu0 %v1211
    %1241 = vmatprep.subr.bf16.mxu0 0
    %1242 = vmatpush1.bf16.msra.mxu0 %v1212
    %1243 = vmatprep.subr.bf16.mxu0 0
    %1244 = vmatpush1.bf16.msra.mxu0 %v1213
    %1245 = vmatprep.subr.bf16.mxu0 0
    %1246 = vmatpush1.bf16.msra.mxu0 %v1214
    %1247 = vmatprep.subr.bf16.mxu0 0
    %1248 = vmatpush1.bf16.msra.mxu0 %v1215
    %1249 = vmatprep.subr.bf16.mxu0 0
    %1250 = vmatpush1.bf16.msra.mxu0 0
    %1251 = vmatprep.subr.bf16.mxu0 0
    %1252 = vmatpush1.bf16.msra.mxu0 0
    %1253 = vmatprep.subr.bf16.mxu0 0
    %1254 = vmatpush1.bf16.msra.mxu0 0
    %1255 = vmatprep.subr.bf16.mxu0 0
    %1256 = vmatpush1.bf16.msra.mxu0 0
    %1257 = vmatprep.subr.bf16.mxu0 0
    %1258 = vmatpush1.bf16.msra.mxu0 0
    %1259 = vmatprep.subr.bf16.mxu0 0
    %1260 = vmatpush1.bf16.msra.mxu0 0
    %1261 = vmatprep.subr.bf16.mxu0 0
    %1262 = vmatpush1.bf16.msra.mxu0 0
    %1263 = vmatprep.subr.bf16.mxu0 0
    %1264 = vmatpush1.bf16.msra.mxu0 0
    %1265 = vmatprep.mubr.bf16.mxu0 0
    %1266 = vmatmul.mubr.bf16.gmra.mrb[0].mxu0 %v140
    %v1267 = vpop.f32.mrb[0].mxu0
    %v1268 = vadd.f32 0.0, %v1267
    %v1269 = vpop.f32.mrb[0].mxu0
    %v1270 = vpop.f32.mrb[0].mxu0
    %v1271 = vadd.f32 0.0, %v1270
    %v1272 = vpop.f32.mrb[0].mxu0
    %1273 = vmatprep.mubr.bf16.mxu0 0
    %1274 = vmatmul.mubr.bf16.gmra.mrb[0].mxu0 %v141
    %v1275 = vpop.f32.mrb[0].mxu0
    %v1276 = vadd.f32 0.0, %v1275
    %v1277 = vpop.f32.mrb[0].mxu0
    %v1278 = vpop.f32.mrb[0].mxu0
    %v1279 = vadd.f32 0.0, %v1278
    %v1280 = vpop.f32.mrb[0].mxu0
    %1281 = vmatprep.mubr.bf16.mxu0 0
    %1282 = vmatmul.mubr.bf16.gmra.mrb[0].mxu0 %v142
    %v1283 = vpop.f32.mrb[0].mxu0
    %v1284 = vadd.f32 0.0, %v1283
    %v1285 = vpop.f32.mrb[0].mxu0
    %v1286 = vpop.f32.mrb[0].mxu0
    %v1287 = vadd.f32 0.0, %v1286
    %v1288 = vpop.f32.mrb[0].mxu0
    %1289 = vmatprep.mubr.bf16.mxu0 0
    %1290 = vmatmul.mubr.bf16.gmra.mrb[0].mxu0 %v143
    %v1291 = vpop.f32.mrb[0].mxu0
    %v1292 = vadd.f32 0.0, %v1291
    %v1293 = vpop.f32.mrb[0].mxu0
    %v1294 = vpop.f32.mrb[0].mxu0
    %v1295 = vadd.f32 0.0, %v1294
    %v1296 = vpop.f32.mrb[0].mxu0
    %1297 = vmatprep.mubr.bf16.mxu0 0
    %1298 = vmatmul.mubr.bf16.gmra.mrb[0].mxu0 %v144
    %v1299 = vpop.f32.mrb[0].mxu0
    %v1300 = vadd.f32 0.0, %v1299
    %v1301 = vpop.f32.mrb[0].mxu0
    %v1302 = vpop.f32.mrb[0].mxu0
    %v1303 = vadd.f32 0.0, %v1302
    %v1304 = vpop.f32.mrb[0].mxu0
    %1305 = vmatprep.mubr.bf16.mxu0 0
    %1306 = vmatmul.mubr.bf16.gmra.mrb[0].mxu0 %v145
    %v1307 = vpop.f32.mrb[0].mxu0
    %v1308 = vadd.f32 0.0, %v1307
    %v1309 = vpop.f32.mrb[0].mxu0
    %v1310 = vpop.f32.mrb[0].mxu0
    %v1311 = vadd.f32 0.0, %v1310
    %v1312 = vpop.f32.mrb[0].mxu0
    %1313 = vmatprep.mubr.bf16.mxu0 0
    %1314 = vmatmul.mubr.bf16.gmra.mrb[0].mxu0 %v146
    %v1315 = vpop.f32.mrb[0].mxu0
    %v1316 = vadd.f32 0.0, %v1315
    %v1317 = vpop.f32.mrb[0].mxu0
    %v1318 = vpop.f32.mrb[0].mxu0
    %v1319 = vadd.f32 0.0, %v1318
    %v1320 = vpop.f32.mrb[0].mxu0
    %1321 = vmatprep.mubr.bf16.mxu0 0
    %1322 = vmatmul.mubr.bf16.gmra.mrb[0].mxu0 %v147
    %v1323 = vpop.f32.mrb[0].mxu0
    %v1324 = vadd.f32 0.0, %v1323
    %v1325 = vpop.f32.mrb[0].mxu0
    %v1326 = vpop.f32.mrb[0].mxu0
    %v1327 = vadd.f32 0.0, %v1326
    %v1328 = vpop.f32.mrb[0].mxu0
    %1329 = vdwg.mxu0
    %v1330 = vmul.f32 %v1268, %v304
    %v1331 = vmul.f32 %v1271, %v309
    %v1332 = vmul.f32 %v1276, %v314
    %v1333 = vmul.f32 %v1279, %v319
    %v1334 = vmul.f32 %v1284, %v324
    %v1335 = vmul.f32 %v1287, %v329
    %v1336 = vmul.f32 %v1292, %v334
    %v1337 = vmul.f32 %v1295, %v339
    %v1338 = vmul.f32 %v1300, %v344
    %v1339 = vmul.f32 %v1303, %v349
    %v1340 = vmul.f32 %v1308, %v354
    %v1341 = vmul.f32 %v1311, %v359
    %v1342 = vmul.f32 %v1316, %v364
    %v1343 = vmul.f32 %v1319, %v369
    %v1344 = vmul.f32 %v1324, %v374
    %v1345 = vmul.f32 %v1327, %v379
    %v1346 = vpack.c.bf16 %v1331, %v1330
    %v1347 = vpack.c.bf16 %v1333, %v1332
    %v1348 = vpack.c.bf16 %v1335, %v1334
    %v1349 = vpack.c.bf16 %v1337, %v1336
    %v1350 = vpack.c.bf16 %v1339, %v1338
    %v1351 = vpack.c.bf16 %v1341, %v1340
    %v1352 = vpack.c.bf16 %v1343, %v1342
    %v1353 = vpack.c.bf16 %v1345, %v1344
    %v1362 = vunpack.c.l.b16 %v1224
    %v1363 = vunpack.c.l.b16 %v1225
    %v1364 = vunpack.c.l.b16 %v1226
    %v1365 = vunpack.c.l.b16 %v1227
    %v1366 = vunpack.c.l.b16 %v1228
    %v1367 = vunpack.c.l.b16 %v1229
    %v1368 = vunpack.c.l.b16 %v1230
    %v1369 = vunpack.c.l.b16 %v1231
    %v1370 = vpack.c.b16 %v1363, %v1362
    %v1371 = vpack.c.b16 %v1365, %v1364
    %v1372 = vpack.c.b16 %v1367, %v1366
    %v1373 = vpack.c.b16 %v1369, %v1368
    %v1379 = vsel %vm429, %v1208, 0
    %v1382 = vsel %vm429, %v1209, 0
    %v1385 = vsel %vm429, %v1210, 0
    %v1388 = vsel %vm429, %v1211, 0
    %v1391 = vsel %vm429, %v1212, 0
    %v1394 = vsel %vm429, %v1213, 0
    %v1397 = vsel %vm429, %v1214, 0
    %v1400 = vsel %vm429, %v1215, 0
    %1402 = vmatprep.subr.bf16.mxu0 0
    %1403 = vmatpush1.bf16.msra.mxu0 %v1370
    %1404 = vmatprep.subr.bf16.mxu0 0
    %1405 = vmatpush1.bf16.msra.mxu0 %v1371
    %1406 = vmatprep.subr.bf16.mxu0 0
    %1407 = vmatpush1.bf16.msra.mxu0 %v1372
    %1408 = vmatprep.subr.bf16.mxu0 0
    %1409 = vmatpush1.bf16.msra.mxu0 %v1373
    %1410 = vmatprep.subr.bf16.mxu0 0
    %1411 = vmatpush1.bf16.msra.mxu0 0
    %1412 = vmatprep.subr.bf16.mxu0 0
    %1413 = vmatpush1.bf16.msra.mxu0 0
    %1414 = vmatprep.subr.bf16.mxu0 0
    %1415 = vmatpush1.bf16.msra.mxu0 0
    %1416 = vmatprep.subr.bf16.mxu0 0
    %1417 = vmatpush1.bf16.msra.mxu0 0
    %1418 = vmatprep.subr.bf16.mxu0 0
    %1419 = vmatpush1.bf16.msra.mxu0 0
    %1420 = vmatprep.subr.bf16.mxu0 0
    %1421 = vmatpush1.bf16.msra.mxu0 0
    %1422 = vmatprep.subr.bf16.mxu0 0
    %1423 = vmatpush1.bf16.msra.mxu0 0
    %1424 = vmatprep.subr.bf16.mxu0 0
    %1425 = vmatpush1.bf16.msra.mxu0 0
    %1426 = vmatprep.subr.bf16.mxu0 0
    %1427 = vmatpush1.bf16.msra.mxu0 0
    %1428 = vmatprep.subr.bf16.mxu0 0
    %1429 = vmatpush1.bf16.msra.mxu0 0
    %1430 = vmatprep.subr.bf16.mxu0 0
    %1431 = vmatpush1.bf16.msra.mxu0 0
    %1432 = vmatprep.subr.bf16.mxu0 0
    %1433 = vmatpush1.bf16.msra.mxu0 0
    %1434 = vmatprep.mubr.bf16.mxu0 0
    %1435 = vmatmul.mubr.bf16.gmra.mrb[0].mxu0 %v1379
    %v1436 = vpop.f32.mrb[0].mxu0
    %v1437 = vadd.f32 0.0, %v1436
    %v1438 = vpop.f32.mrb[0].mxu0
    %v1439 = vpop.f32.mrb[0].mxu0
    %v1440 = vadd.f32 0.0, %v1439
    %v1441 = vpop.f32.mrb[0].mxu0
    %1442 = vmatprep.mubr.bf16.mxu0 0
    %1443 = vmatmul.mubr.bf16.gmra.mrb[0].mxu0 %v1382
    %v1444 = vpop.f32.mrb[0].mxu0
    %v1445 = vadd.f32 0.0, %v1444
    %v1446 = vpop.f32.mrb[0].mxu0
    %v1447 = vpop.f32.mrb[0].mxu0
    %v1448 = vadd.f32 0.0, %v1447
    %v1449 = vpop.f32.mrb[0].mxu0
    %1450 = vmatprep.mubr.bf16.mxu0 0
    %1451 = vmatmul.mubr.bf16.gmra.mrb[0].mxu0 %v1385
    %v1452 = vpop.f32.mrb[0].mxu0
    %v1453 = vadd.f32 0.0, %v1452
    %v1454 = vpop.f32.mrb[0].mxu0
    %v1455 = vpop.f32.mrb[0].mxu0
    %v1456 = vadd.f32 0.0, %v1455
    %v1457 = vpop.f32.mrb[0].mxu0
    %1458 = vmatprep.mubr.bf16.mxu0 0
    %1459 = vmatmul.mubr.bf16.gmra.mrb[0].mxu0 %v1388
    %v1460 = vpop.f32.mrb[0].mxu0
    %v1461 = vadd.f32 0.0, %v1460
    %v1462 = vpop.f32.mrb[0].mxu0
    %v1463 = vpop.f32.mrb[0].mxu0
    %v1464 = vadd.f32 0.0, %v1463
    %v1465 = vpop.f32.mrb[0].mxu0
    %1466 = vmatprep.mubr.bf16.mxu0 0
    %1467 = vmatmul.mubr.bf16.gmra.mrb[0].mxu0 %v1391
    %v1468 = vpop.f32.mrb[0].mxu0
    %v1469 = vadd.f32 0.0, %v1468
    %v1470 = vpop.f32.mrb[0].mxu0
    %v1471 = vpop.f32.mrb[0].mxu0
    %v1472 = vadd.f32 0.0, %v1471
    %v1473 = vpop.f32.mrb[0].mxu0
    %1474 = vmatprep.mubr.bf16.mxu0 0
    %1475 = vmatmul.mubr.bf16.gmra.mrb[0].mxu0 %v1394
    %v1476 = vpop.f32.mrb[0].mxu0
    %v1477 = vadd.f32 0.0, %v1476
    %v1478 = vpop.f32.mrb[0].mxu0
    %v1479 = vpop.f32.mrb[0].mxu0
    %v1480 = vadd.f32 0.0, %v1479
    %v1481 = vpop.f32.mrb[0].mxu0
    %1482 = vmatprep.mubr.bf16.mxu0 0
    %1483 = vmatmul.mubr.bf16.gmra.mrb[0].mxu0 %v1397
    %v1484 = vpop.f32.mrb[0].mxu0
    %v1485 = vadd.f32 0.0, %v1484
    %v1486 = vpop.f32.mrb[0].mxu0
    %v1487 = vpop.f32.mrb[0].mxu0
    %v1488 = vadd.f32 0.0, %v1487
    %v1489 = vpop.f32.mrb[0].mxu0
    %1490 = vmatprep.mubr.bf16.mxu0 0
    %1491 = vmatmul.mubr.bf16.gmra.mrb[0].mxu0 %v1400
    %v1492 = vpop.f32.mrb[0].mxu0
    %v1493 = vadd.f32 0.0, %v1492
    %v1494 = vpop.f32.mrb[0].mxu0
    %v1495 = vpop.f32.mrb[0].mxu0
    %v1496 = vadd.f32 0.0, %v1495
    %v1497 = vpop.f32.mrb[0].mxu0
    %1498 = vdwg.mxu0
    %v1507 = vunpack.c.l.b16 %v1216
    %v1508 = vunpack.c.l.b16 %v1217
    %v1509 = vunpack.c.l.b16 %v1218
    %v1510 = vunpack.c.l.b16 %v1219
    %v1511 = vunpack.c.l.b16 %v1220
    %v1512 = vunpack.c.l.b16 %v1221
    %v1513 = vunpack.c.l.b16 %v1222
    %v1514 = vunpack.c.l.b16 %v1223
    %v1515 = vpack.c.b16 %v1508, %v1507
    %v1516 = vpack.c.b16 %v1510, %v1509
    %v1517 = vpack.c.b16 %v1512, %v1511
    %v1518 = vpack.c.b16 %v1514, %v1513
    %v1524 = vsel %vm429, %v1346, 0
    %v1527 = vsel %vm429, %v1347, 0
    %v1530 = vsel %vm429, %v1348, 0
    %v1533 = vsel %vm429, %v1349, 0
    %v1536 = vsel %vm429, %v1350, 0
    %v1539 = vsel %vm429, %v1351, 0
    %v1542 = vsel %vm429, %v1352, 0
    %v1545 = vsel %vm429, %v1353, 0
    %1547 = vmatprep.subr.bf16.mxu0 0
    %1548 = vmatpush1.bf16.msra.mxu0 %v1515
    %1549 = vmatprep.subr.bf16.mxu0 0
    %1550 = vmatpush1.bf16.msra.mxu0 %v1516
    %1551 = vmatprep.subr.bf16.mxu0 0
    %1552 = vmatpush1.bf16.msra.mxu0 %v1517
    %1553 = vmatprep.subr.bf16.mxu0 0
    %1554 = vmatpush1.bf16.msra.mxu0 %v1518
    %1555 = vmatprep.subr.bf16.mxu0 0
    %1556 = vmatpush1.bf16.msra.mxu0 0
    %1557 = vmatprep.subr.bf16.mxu0 0
    %1558 = vmatpush1.bf16.msra.mxu0 0
    %1559 = vmatprep.subr.bf16.mxu0 0
    %1560 = vmatpush1.bf16.msra.mxu0 0
    %1561 = vmatprep.subr.bf16.mxu0 0
    %1562 = vmatpush1.bf16.msra.mxu0 0
    %1563 = vmatprep.subr.bf16.mxu0 0
    %1564 = vmatpush1.bf16.msra.mxu0 0
    %1565 = vmatprep.subr.bf16.mxu0 0
    %1566 = vmatpush1.bf16.msra.mxu0 0
    %1567 = vmatprep.subr.bf16.mxu0 0
    %1568 = vmatpush1.bf16.msra.mxu0 0
    %1569 = vmatprep.subr.bf16.mxu0 0
    %1570 = vmatpush1.bf16.msra.mxu0 0
    %1571 = vmatprep.subr.bf16.mxu0 0
    %1572 = vmatpush1.bf16.msra.mxu0 0
    %1573 = vmatprep.subr.bf16.mxu0 0
    %1574 = vmatpush1.bf16.msra.mxu0 0
    %1575 = vmatprep.subr.bf16.mxu0 0
    %1576 = vmatpush1.bf16.msra.mxu0 0
    %1577 = vmatprep.subr.bf16.mxu0 0
    %1578 = vmatpush1.bf16.msra.mxu0 0
    %1579 = vmatprep.mubr.bf16.mxu0 0
    %1580 = vmatmul.mubr.bf16.gmra.mrb[0].mxu0 %v1524
    %v1581 = vpop.f32.mrb[0].mxu0
    %v1582 = vadd.f32 %v1437, %v1581
    %v1583 = vpop.f32.mrb[0].mxu0
    %v1584 = vpop.f32.mrb[0].mxu0
    %v1585 = vadd.f32 %v1440, %v1584
    %v1586 = vpop.f32.mrb[0].mxu0
    %1587 = vmatprep.mubr.bf16.mxu0 0
    %1588 = vmatmul.mubr.bf16.gmra.mrb[0].mxu0 %v1527
    %v1589 = vpop.f32.mrb[0].mxu0
    %v1590 = vadd.f32 %v1445, %v1589
    %v1591 = vpop.f32.mrb[0].mxu0
    %v1592 = vpop.f32.mrb[0].mxu0
    %v1593 = vadd.f32 %v1448, %v1592
    %v1594 = vpop.f32.mrb[0].mxu0
    %1595 = vmatprep.mubr.bf16.mxu0 0
    %1596 = vmatmul.mubr.bf16.gmra.mrb[0].mxu0 %v1530
    %v1597 = vpop.f32.mrb[0].mxu0
    %v1598 = vadd.f32 %v1453, %v1597
    %v1599 = vpop.f32.mrb[0].mxu0
    %v1600 = vpop.f32.mrb[0].mxu0
    %v1601 = vadd.f32 %v1456, %v1600
    %v1602 = vpop.f32.mrb[0].mxu0
    %1603 = vmatprep.mubr.bf16.mxu0 0
    %1604 = vmatmul.mubr.bf16.gmra.mrb[0].mxu0 %v1533
    %v1605 = vpop.f32.mrb[0].mxu0
    %v1606 = vadd.f32 %v1461, %v1605
    %v1607 = vpop.f32.mrb[0].mxu0
    %v1608 = vpop.f32.mrb[0].mxu0
    %v1609 = vadd.f32 %v1464, %v1608
    %v1610 = vpop.f32.mrb[0].mxu0
    %1611 = vmatprep.mubr.bf16.mxu0 0
    %1612 = vmatmul.mubr.bf16.gmra.mrb[0].mxu0 %v1536
    %v1613 = vpop.f32.mrb[0].mxu0
    %v1614 = vadd.f32 %v1469, %v1613
    %v1615 = vpop.f32.mrb[0].mxu0
    %v1616 = vpop.f32.mrb[0].mxu0
    %v1617 = vadd.f32 %v1472, %v1616
    %v1618 = vpop.f32.mrb[0].mxu0
    %1619 = vmatprep.mubr.bf16.mxu0 0
    %1620 = vmatmul.mubr.bf16.gmra.mrb[0].mxu0 %v1539
    %v1621 = vpop.f32.mrb[0].mxu0
    %v1622 = vadd.f32 %v1477, %v1621
    %v1623 = vpop.f32.mrb[0].mxu0
    %v1624 = vpop.f32.mrb[0].mxu0
    %v1625 = vadd.f32 %v1480, %v1624
    %v1626 = vpop.f32.mrb[0].mxu0
    %1627 = vmatprep.mubr.bf16.mxu0 0
    %1628 = vmatmul.mubr.bf16.gmra.mrb[0].mxu0 %v1542
    %v1629 = vpop.f32.mrb[0].mxu0
    %v1630 = vadd.f32 %v1485, %v1629
    %v1631 = vpop.f32.mrb[0].mxu0
    %v1632 = vpop.f32.mrb[0].mxu0
    %v1633 = vadd.f32 %v1488, %v1632
    %v1634 = vpop.f32.mrb[0].mxu0
    %1635 = vmatprep.mubr.bf16.mxu0 0
    %1636 = vmatmul.mubr.bf16.gmra.mrb[0].mxu0 %v1545
    %v1637 = vpop.f32.mrb[0].mxu0
    %v1638 = vadd.f32 %v1493, %v1637
    %v1639 = vpop.f32.mrb[0].mxu0
    %v1640 = vpop.f32.mrb[0].mxu0
    %v1641 = vadd.f32 %v1496, %v1640
    %v1642 = vpop.f32.mrb[0].mxu0
    %1643 = vdwg.mxu0
    %v1645 = vlaneseq
    %v1646 = vshrl.u32 %v1645, 7
    %v1647 = vsub.s32 0, %v1646
    %v1648 = vrot.slane %v1232, %v1647
    %v1650 = vadd.f32 %v1582, %v1648
    %v1651 = vadd.f32 %v1585, %v1648
    %v1652 = vadd.f32 %v1590, %v1648
    %v1653 = vadd.f32 %v1593, %v1648
    %v1654 = vadd.f32 %v1598, %v1648
    %v1655 = vadd.f32 %v1601, %v1648
    %v1656 = vadd.f32 %v1606, %v1648
    %v1657 = vadd.f32 %v1609, %v1648
    %v1658 = vadd.f32 %v1614, %v1648
    %v1659 = vadd.f32 %v1617, %v1648
    %v1660 = vadd.f32 %v1622, %v1648
    %v1661 = vadd.f32 %v1625, %v1648
    %v1662 = vadd.f32 %v1630, %v1648
    %v1663 = vadd.f32 %v1633, %v1648
    %v1664 = vadd.f32 %v1638, %v1648
    %v1665 = vadd.f32 %v1641, %v1648
    %v1666 = vlaneseq
    %v1667 = vand.u32 %v1666, 127
    %vm1668 = vcmp.lt.s32.totalorder %v1667, 32
    %v1669 = vsel %vm1668, %v1650, -1e+30
    %v1670 = vsel %vm1668, %v1651, -1e+30
    %v1671 = vsel %vm1668, %v1652, -1e+30
    %v1672 = vsel %vm1668, %v1653, -1e+30
    %v1673 = vsel %vm1668, %v1654, -1e+30
    %v1674 = vsel %vm1668, %v1655, -1e+30
    %v1675 = vsel %vm1668, %v1656, -1e+30
    %v1676 = vsel %vm1668, %v1657, -1e+30
    %v1677 = vsel %vm1668, %v1658, -1e+30
    %v1678 = vsel %vm1668, %v1659, -1e+30
    %v1679 = vsel %vm1668, %v1660, -1e+30
    %v1680 = vsel %vm1668, %v1661, -1e+30
    %v1681 = vsel %vm1668, %v1662, -1e+30
    %v1682 = vsel %vm1668, %v1663, -1e+30
    %v1683 = vsel %vm1668, %v1664, -1e+30
    %v1684 = vsel %vm1668, %v1665, -1e+30
    %1685 = vmax.xlane.f32.xlu0 %v1669
    %v1686 = vpop.xlane.xlu0 %1685
    %1687 = vmax.xlane.f32.xlu0 %v1670
    %v1688 = vpop.xlane.xlu0 %1687
    %1689 = vmax.xlane.f32.xlu0 %v1671
    %v1690 = vpop.xlane.xlu0 %1689
    %1691 = vmax.xlane.f32.xlu0 %v1672
    %v1692 = vpop.xlane.xlu0 %1691
    %1693 = vmax.xlane.f32.xlu0 %v1673
    %v1694 = vpop.xlane.xlu0 %1693
    %1695 = vmax.xlane.f32.xlu0 %v1674
    %v1696 = vpop.xlane.xlu0 %1695
    %1697 = vmax.xlane.f32.xlu0 %v1675
    %v1698 = vpop.xlane.xlu0 %1697
    %1699 = vmax.xlane.f32.xlu0 %v1676
    %v1700 = vpop.xlane.xlu0 %1699
    %1701 = vmax.xlane.f32.xlu0 %v1677
    %v1702 = vpop.xlane.xlu0 %1701
    %1703 = vmax.xlane.f32.xlu0 %v1678
    %v1704 = vpop.xlane.xlu0 %1703
    %1705 = vmax.xlane.f32.xlu0 %v1679
    %v1706 = vpop.xlane.xlu0 %1705
    %1707 = vmax.xlane.f32.xlu0 %v1680
    %v1708 = vpop.xlane.xlu0 %1707
    %1709 = vmax.xlane.f32.xlu0 %v1681
    %v1710 = vpop.xlane.xlu0 %1709
    %1711 = vmax.xlane.f32.xlu0 %v1682
    %v1712 = vpop.xlane.xlu0 %1711
    %1713 = vmax.xlane.f32.xlu0 %v1683
    %v1714 = vpop.xlane.xlu0 %1713
    %1715 = vmax.xlane.f32.xlu0 %v1684
    %v1716 = vpop.xlane.xlu0 %1715
    %v1717 = vsub.f32 %v1669, %v1686
    %v1718 = vsub.f32 %v1670, %v1688
    %v1719 = vsub.f32 %v1671, %v1690
    %v1720 = vsub.f32 %v1672, %v1692
    %v1721 = vsub.f32 %v1673, %v1694
    %v1722 = vsub.f32 %v1674, %v1696
    %v1723 = vsub.f32 %v1675, %v1698
    %v1724 = vsub.f32 %v1676, %v1700
    %v1725 = vsub.f32 %v1677, %v1702
    %v1726 = vsub.f32 %v1678, %v1704
    %v1727 = vsub.f32 %v1679, %v1706
    %v1728 = vsub.f32 %v1680, %v1708
    %v1729 = vsub.f32 %v1681, %v1710
    %v1730 = vsub.f32 %v1682, %v1712
    %v1731 = vsub.f32 %v1683, %v1714
    %v1732 = vsub.f32 %v1684, %v1716
    %v1733 = vmul.f32 %v1717, 1.442695
    %v1734 = vpow.pop %v1733
    %v1735 = vmul.f32 %v1718, 1.442695
    %v1736 = vpow.pop %v1735
    %v1737 = vmul.f32 %v1719, 1.442695
    %v1738 = vpow.pop %v1737
    %v1739 = vmul.f32 %v1720, 1.442695
    %v1740 = vpow.pop %v1739
    %v1741 = vmul.f32 %v1721, 1.442695
    %v1742 = vpow.pop %v1741
    %v1743 = vmul.f32 %v1722, 1.442695
    %v1744 = vpow.pop %v1743
    %v1745 = vmul.f32 %v1723, 1.442695
    %v1746 = vpow.pop %v1745
    %v1747 = vmul.f32 %v1724, 1.442695
    %v1748 = vpow.pop %v1747
    %v1749 = vmul.f32 %v1725, 1.442695
    %v1750 = vpow.pop %v1749
    %v1751 = vmul.f32 %v1726, 1.442695
    %v1752 = vpow.pop %v1751
    %v1753 = vmul.f32 %v1727, 1.442695
    %v1754 = vpow.pop %v1753
    %v1755 = vmul.f32 %v1728, 1.442695
    %v1756 = vpow.pop %v1755
    %v1757 = vmul.f32 %v1729, 1.442695
    %v1758 = vpow.pop %v1757
    %v1759 = vmul.f32 %v1730, 1.442695
    %v1760 = vpow.pop %v1759
    %v1761 = vmul.f32 %v1731, 1.442695
    %v1762 = vpow.pop %v1761
    %v1763 = vmul.f32 %v1732, 1.442695
    %v1764 = vpow.pop %v1763
    %1765 = vadd.xlane.f32.xlu0 %v1734
    %v1766 = vpop.xlane.xlu0 %1765
    %1767 = vadd.xlane.f32.xlu0 %v1736
    %v1768 = vpop.xlane.xlu0 %1767
    %1769 = vadd.xlane.f32.xlu0 %v1738
    %v1770 = vpop.xlane.xlu0 %1769
    %1771 = vadd.xlane.f32.xlu0 %v1740
    %v1772 = vpop.xlane.xlu0 %1771
    %1773 = vadd.xlane.f32.xlu0 %v1742
    %v1774 = vpop.xlane.xlu0 %1773
    %1775 = vadd.xlane.f32.xlu0 %v1744
    %v1776 = vpop.xlane.xlu0 %1775
    %1777 = vadd.xlane.f32.xlu0 %v1746
    %v1778 = vpop.xlane.xlu0 %1777
    %1779 = vadd.xlane.f32.xlu0 %v1748
    %v1780 = vpop.xlane.xlu0 %1779
    %1781 = vadd.xlane.f32.xlu0 %v1750
    %v1782 = vpop.xlane.xlu0 %1781
    %1783 = vadd.xlane.f32.xlu0 %v1752
    %v1784 = vpop.xlane.xlu0 %1783
    %1785 = vadd.xlane.f32.xlu0 %v1754
    %v1786 = vpop.xlane.xlu0 %1785
    %1787 = vadd.xlane.f32.xlu0 %v1756
    %v1788 = vpop.xlane.xlu0 %1787
    %1789 = vadd.xlane.f32.xlu0 %v1758
    %v1790 = vpop.xlane.xlu0 %1789
    %1791 = vadd.xlane.f32.xlu0 %v1760
    %v1792 = vpop.xlane.xlu0 %1791
    %1793 = vadd.xlane.f32.xlu0 %v1762
    %v1794 = vpop.xlane.xlu0 %1793
    %1795 = vadd.xlane.f32.xlu0 %v1764
    %v1796 = vpop.xlane.xlu0 %1795
    %v1797 = vlog2.pop %v1766
    %v1798 = vmul.f32 %v1797, 0.6931472
    %v1799 = vlog2.pop %v1768
    %v1800 = vmul.f32 %v1799, 0.6931472
    %v1801 = vlog2.pop %v1770
    %v1802 = vmul.f32 %v1801, 0.6931472
    %v1803 = vlog2.pop %v1772
    %v1804 = vmul.f32 %v1803, 0.6931472
    %v1805 = vlog2.pop %v1774
    %v1806 = vmul.f32 %v1805, 0.6931472
    %v1807 = vlog2.pop %v1776
    %v1808 = vmul.f32 %v1807, 0.6931472
    %v1809 = vlog2.pop %v1778
    %v1810 = vmul.f32 %v1809, 0.6931472
    %v1811 = vlog2.pop %v1780
    %v1812 = vmul.f32 %v1811, 0.6931472
    %v1813 = vlog2.pop %v1782
    %v1814 = vmul.f32 %v1813, 0.6931472
    %v1815 = vlog2.pop %v1784
    %v1816 = vmul.f32 %v1815, 0.6931472
    %v1817 = vlog2.pop %v1786
    %v1818 = vmul.f32 %v1817, 0.6931472
    %v1819 = vlog2.pop %v1788
    %v1820 = vmul.f32 %v1819, 0.6931472
    %v1821 = vlog2.pop %v1790
    %v1822 = vmul.f32 %v1821, 0.6931472
    %v1823 = vlog2.pop %v1792
    %v1824 = vmul.f32 %v1823, 0.6931472
    %v1825 = vlog2.pop %v1794
    %v1826 = vmul.f32 %v1825, 0.6931472
    %v1827 = vlog2.pop %v1796
    %v1828 = vmul.f32 %v1827, 0.6931472
    %v1829 = vsub.f32 %v1717, %v1798
    %v1830 = vsub.f32 %v1718, %v1800
    %v1831 = vsub.f32 %v1719, %v1802
    %v1832 = vsub.f32 %v1720, %v1804
    %v1833 = vsub.f32 %v1721, %v1806
    %v1834 = vsub.f32 %v1722, %v1808
    %v1835 = vsub.f32 %v1723, %v1810
    %v1836 = vsub.f32 %v1724, %v1812
    %v1837 = vsub.f32 %v1725, %v1814
    %v1838 = vsub.f32 %v1726, %v1816
    %v1839 = vsub.f32 %v1727, %v1818
    %v1840 = vsub.f32 %v1728, %v1820
    %v1841 = vsub.f32 %v1729, %v1822
    %v1842 = vsub.f32 %v1730, %v1824
    %v1843 = vsub.f32 %v1731, %v1826
    %v1844 = vsub.f32 %v1732, %v1828
    %1845 = vst [vmem:[#allocation2] sm:$0xff] %v1829
    %1846 = vst [vmem:[#allocation2 + $0x8] sm:$0xff] %v1830
    %1847 = vst [vmem:[#allocation2 + $0x10] sm:$0xff] %v1831
    %1848 = vst [vmem:[#allocation2 + $0x18] sm:$0xff] %v1832
    %1849 = vst [vmem:[#allocation2 + $0x20] sm:$0xff] %v1833
    %1850 = vst [vmem:[#allocation2 + $0x28] sm:$0xff] %v1834
    %1851 = vst [vmem:[#allocation2 + $0x30] sm:$0xff] %v1835
    %1852 = vst [vmem:[#allocation2 + $0x38] sm:$0xff] %v1836
    %1853 = vst [vmem:[#allocation2 + $0x40] sm:$0xff] %v1837
    %1854 = vst [vmem:[#allocation2 + $0x48] sm:$0xff] %v1838
    %1855 = vst [vmem:[#allocation2 + $0x50] sm:$0xff] %v1839
    %1856 = vst [vmem:[#allocation2 + $0x58] sm:$0xff] %v1840
    %1857 = vst [vmem:[#allocation2 + $0x60] sm:$0xff] %v1841
    %1858 = vst [vmem:[#allocation2 + $0x68] sm:$0xff] %v1842
    %1859 = vst [vmem:[#allocation2 + $0x70] sm:$0xff] %v1843
    %1860 = vst [vmem:[#allocation2 + $0x78] sm:$0xff] %v1844
    // Predicated region
    $region50: #{tpu_custom_call.1} parent=1 // pred_check
      _
    $region51: #{tpu_custom_call.1} parent=1 // pred_check_branch
      %1862 = sbr.rel (0) target = $region53
    $region52: #{tpu_custom_call.1} parent=1 // pred_region
      %s1864 = ssub.s32 2048, 2048
      %1865 = vsyncadd [#allocation3], %s1864
      %s1866 = sshll.u32 [#allocation2], 4
      %s1867 = int_to_ptr.vmem [resolvable:$true] %s1866
      %1872 = dma.vmem_to_hbm [thread:$0]  %s1867, 2048, %s12, [#allocation3], 128, 128, 8
    $region53: #{tpu_custom_call.1} parent=1 // pred_fallthru
      _
    // Predicated region
    $region54: #{tpu_custom_call.1} parent=1 // pred_check
      _
    $region55: #{tpu_custom_call.1} parent=1 // pred_check_branch
      %1874 = sbr.rel (0) target = $region57
    $region56: #{tpu_custom_call.1} parent=1 // pred_region
      %1875 = dma.done [#allocation3], 2048
    $region57: #{tpu_custom_call.1} parent=1 // pred_fallthru
      _
    %1876 = vsyncpa [#allocation3], 1

</llo_original>
